<compile_context>
chip_gen: v7x
topology: tpu7x:2x2x1
jax: 0.10.0
libtpu: 0.0.40
codegen_flags: <defaults>
</compile_context>

<pallas_src>
import math
from functools import partial

import numpy as np
import jax
import jax.numpy as jnp
from jax import lax
from jax.experimental import pallas as pl
from jax.experimental.pallas import tpu as pltpu

EPS = 1e-5  # InstanceNorm1d default eps


def _instance_norm(t):
    # t: (N, C) channels-last; InstanceNorm1d (affine=False) normalizes over the
    # spatial axis N per channel, biased variance, eps inside the sqrt.
    mu = jnp.mean(t, axis=0, keepdims=True)
    var = jnp.mean((t - mu) ** 2, axis=0, keepdims=True)
    return (t - mu) * lax.rsqrt(var + EPS)


def attentional_propagation_kernel(
        x_ref, src_ref,
        wq_ref, bq_ref, wk_ref, bk_ref, wv_ref, bv_ref,
        wm_ref, bm_ref, w1x_ref, w1m_ref, b1_ref, w2_ref, b2_ref,
        o_ref, macc_ref, *, mxu_dtype, approx_recip):
    f32 = jnp.float32
    h = pl.program_id(1)
    last_h = pl.num_programs(1) - 1

    @pl.when(h == 0)
    def _():
        macc_ref[...] = jnp.zeros_like(macc_ref)

    x = x_ref[...]            # (N, D) f32
    src = src_ref[...]        # (M, D) f32
    x_mxu = x.astype(mxu_dtype)
    src_mxu = src.astype(mxu_dtype)

    # --- per-head q / k / v projections (1x1 convs); scale folded into wq/bq ---
    q = jnp.dot(x_mxu, wq_ref[...], preferred_element_type=f32) + bq_ref[...]     # (N, dim)
    k = jnp.dot(src_mxu, wk_ref[...], preferred_element_type=f32) + bk_ref[...]   # (M, dim)
    v = jnp.dot(src_mxu, wv_ref[...], preferred_element_type=f32) + bv_ref[...]   # (M, dim)

    # --- scores: NT contraction on the MXU (no explicit k transpose) ---
    s = lax.dot_general(
        q.astype(mxu_dtype), k.astype(mxu_dtype),
        dimension_numbers=(((1,), (1,)), ((), ())),
        preferred_element_type=f32)                                               # (N, M)

    # --- softmax over M with deferred normalization (f32 statistics) ---
    s = s - jnp.max(s, axis=-1, keepdims=True)
    e = jnp.exp(s)
    rowsum = jnp.sum(e, axis=-1, keepdims=True)                                   # (N, 1)
    acc = jnp.dot(e.astype(mxu_dtype), v.astype(mxu_dtype),
                  preferred_element_type=f32)                                     # (N, dim)
    msg_h = acc * pl.reciprocal(rowsum, approx=approx_recip)

    # --- accumulate the merge conv directly (no lane-axis concat of heads) ---
    macc_ref[...] += jnp.dot(msg_h.astype(mxu_dtype), wm_ref[...],
                             preferred_element_type=f32)                          # (N, D)

    # --- epilogue on the last head: merge bias + InstanceNorm + MLP ---
    @pl.when(h == last_h)
    def _():
        m = _instance_norm(macc_ref[...] + bm_ref[...])                           # (N, D)
        # MLP layer 1 on concat([x, m]) without materializing the concat.
        h1 = (jnp.dot(x_mxu, w1x_ref[...], preferred_element_type=f32)
              + jnp.dot(m.astype(mxu_dtype), w1m_ref[...], preferred_element_type=f32)
              + b1_ref[...])                                                      # (N, 2D)
        h1 = jnp.maximum(_instance_norm(h1), 0.0)
        out = jnp.dot(h1.astype(mxu_dtype), w2_ref[...],
                      preferred_element_type=f32) + b2_ref[...]                   # (N, D)
        o_ref[...] = out.astype(o_ref.dtype)


def _vmem_limit_bytes(N, M, D, dim, mxu_itemsize):
    """Rough per-grid-step VMEM footprint estimate (f32 activations)."""
    f = 4
    act = (N * M                      # score / exp matrix (one head)
           + N * dim + 2 * M * dim    # q, k, v (one head)
           + 2 * N * D                # merge accumulator + normalized message
           + 2 * N * 2 * D            # h1 (+ pre-relu temp)
           + N * D)                   # output temp
    io = 2 * (N * D + M * D) + 2 * N * D              # x/src (double-buffered) + out block
    wts = (4 * D * D + 2 * D * 2 * D + 6 * D) * mxu_itemsize
    est = (act + io) * f + wts
    # 1.5x headroom; never below the 32 MiB default, capped for v7x's 64 MiB VMEM.
    return int(min(max(1.5 * est, 32 * 1024 * 1024), 56 * 1024 * 1024))


def attentional_propagation(x, source, params, num_heads, *, mxu_dtype=jnp.bfloat16):
    """x: (B, D, N), source: (B, D, M) (PyTorch layout). Returns (B, D, N)."""
    B, D, N = x.shape
    M = source.shape[2]
    assert D % num_heads == 0, "feature_dim must be divisible by num_heads"
    dim = D // num_heads
    scale = 1.0 / math.sqrt(dim)
    f32 = jnp.float32

    # channels-last for the kernel
    # TODO(synk): keep the surrounding model channels-last to avoid these HBM round trips.
    x_cl = jnp.transpose(x, (0, 2, 1))         # (B, N, D)
    src_cl = jnp.transpose(source, (0, 2, 1))  # (B, M, D)

    # torch head split: channel c = d*H + h ; remap so new channel = h*dim + d
    perm = np.arange(D).reshape(dim, num_heads).T.reshape(-1)

    def proj_heads(w, b, s=1.0):
        # conv weight (out, in), bias (out,) -> per-head (H, D, dim) / (H, 1, dim)
        w_cl = (w.T[:, perm] * s).astype(mxu_dtype)                    # (D_in, D_out) head-major cols
        w_h = w_cl.reshape(D, num_heads, dim).transpose(1, 0, 2)       # (H, D, dim)
        b_h = (b[perm] * s).astype(f32).reshape(num_heads, 1, dim)     # (H, 1, dim)
        return w_h, b_h

    # fold the 1/sqrt(dim) attention scale into the q projection
    wq_h, bq_h = proj_heads(params['wq'], params['bq'], scale)
    wk_h, bk_h = proj_heads(params['wk'], params['bk'])
    wv_h, bv_h = proj_heads(params['wv'], params['bv'])

    wm_h = params['wm'].T[perm, :].reshape(num_heads, dim, D).astype(mxu_dtype)   # (H, dim, D)
    bm = params['bm'].astype(f32)[None, :]                                         # (1, D)

    w1t = params['w1'].T                                 # (2D_in, 2D_out)
    w1x = w1t[:D, :].astype(mxu_dtype)                   # acts on x
    w1m = w1t[D:, :].astype(mxu_dtype)                   # acts on the message
    b1 = params['b1'].astype(f32)[None, :]               # (1, 2D)
    w2 = params['w2'].T.astype(mxu_dtype)                # (2D, D)
    b2 = params['b2'].astype(f32)[None, :]               # (1, D)

    def headw_spec(a):   # per-head weight: block over the leading head axis
        return pl.BlockSpec((None,) + a.shape[1:], lambda b, h: (h, 0, 0))

    def const_spec(a):   # resident constant (2-D)
        return pl.BlockSpec(a.shape, lambda b, h: (0,) * a.ndim)

    kernel = partial(attentional_propagation_kernel,
                     mxu_dtype=mxu_dtype,
                     approx_recip=(mxu_dtype != jnp.float32))

    out_cl = pl.pallas_call(
        kernel,
        out_shape=jax.ShapeDtypeStruct((B, N, D), x.dtype),
        grid=(B, num_heads),
        in_specs=[
            pl.BlockSpec((None, N, D), lambda b, h: (b, 0, 0)),
            pl.BlockSpec((None, M, D), lambda b, h: (b, 0, 0)),
            headw_spec(wq_h), headw_spec(bq_h),
            headw_spec(wk_h), headw_spec(bk_h),
            headw_spec(wv_h), headw_spec(bv_h),
            headw_spec(wm_h),
            const_spec(bm),
            const_spec(w1x), const_spec(w1m), const_spec(b1),
            const_spec(w2), const_spec(b2),
        ],
        out_specs=pl.BlockSpec((None, N, D), lambda b, h: (b, 0, 0)),
        scratch_shapes=[pltpu.VMEM((N, D), jnp.float32)],   # merged-message accumulator
        compiler_params=pltpu.CompilerParams(
            dimension_semantics=("parallel", "arbitrary"),
            vmem_limit_bytes=_vmem_limit_bytes(N, M, D, dim,
                                               jnp.dtype(mxu_dtype).itemsize)),
    )(x_cl, src_cl, wq_h, bq_h, wk_h, bk_h, wv_h, bv_h,
      wm_h, bm, w1x, w1m, b1, w2, b2)

    return jnp.transpose(out_cl, (0, 2, 1))      # back to (B, D, N)


def reference(x, source, params, num_heads):
    """Pure-JAX reimplementation of the PyTorch forward (torch layout)."""
    B, D, N = x.shape
    dim = D // num_heads

    def conv1d(w, b, t):  # 1x1 conv, t: (B, C_in, L)
        return jnp.einsum('oi,bil->bol', w, t) + b[None, :, None]

    def inorm(t):         # InstanceNorm1d, affine=False
        mu = jnp.mean(t, axis=-1, keepdims=True)
        var = jnp.mean((t - mu) ** 2, axis=-1, keepdims=True)
        return (t - mu) / jnp.sqrt(var + EPS)

    q = conv1d(params['wq'], params['bq'], x).reshape(B, dim, num_heads, N)
    k = conv1d(params['wk'], params['bk'], source).reshape(B, dim, num_heads, -1)
    v = conv1d(params['wv'], params['bv'], source).reshape(B, dim, num_heads, -1)
    scores = jnp.einsum('bdhn,bdhm->bhnm', q, k) / dim ** 0.5
    prob = jax.nn.softmax(scores, axis=-1)
    msg = jnp.einsum('bhnm,bdhm->bdhn', prob, v).reshape(B, D, N)
    m = inorm(conv1d(params['wm'], params['bm'], msg))
    y = jnp.concatenate([x, m], axis=1)
    h1 = jax.nn.relu(inorm(conv1d(params['w1'], params['b1'], y)))
    return conv1d(params['w2'], params['b2'], h1)


if __name__ == "__main__":
    B, D, H, N, M = 2, 32, 4, 16, 16
    key = jax.random.PRNGKey(0)
    keys = jax.random.split(key, 16)

    def w(k, shape, fan_in):
        return jax.random.normal(k, shape, jnp.float32) / math.sqrt(fan_in)

    params = {
        'wq': w(keys[0], (D, D), D), 'bq': w(keys[1], (D,), D),
        'wk': w(keys[2], (D, D), D), 'bk': w(keys[3], (D,), D),
        'wv': w(keys[4], (D, D), D), 'bv': w(keys[5], (D,), D),
        'wm': w(keys[6], (D, D), D), 'bm': w(keys[7], (D,), D),
        'w1': w(keys[8], (2 * D, 2 * D), 2 * D), 'b1': w(keys[9], (2 * D,), 2 * D),
        'w2': w(keys[10], (D, 2 * D), 2 * D),
        'b2': jnp.zeros((D,), jnp.float32),      # nn.init.constant_(mlp[-1].bias, 0.0)
    }
    x = jax.random.normal(keys[11], (B, D, N), jnp.float32)
    source = jax.random.normal(keys[12], (B, D, M), jnp.float32)

    ref = jax.block_until_ready(reference(x, source, params, H))

    # Full-f32 path: should match the reference tightly.
    out_f32 = jax.block_until_ready(
        attentional_propagation(x, source, params, H, mxu_dtype=jnp.float32))
    assert out_f32.shape == (B, D, N)
    err_f32 = float(jnp.max(jnp.abs(out_f32 - ref)))
    assert jnp.allclose(out_f32, ref, atol=2e-3, rtol=2e-3), err_f32

    # bf16 MXU-operand path (default): f32 accumulation, looser tolerance.
    out_bf16 = jax.block_until_ready(attentional_propagation(x, source, params, H))
    err_bf16 = float(jnp.max(jnp.abs(out_bf16 - ref)))
    assert jnp.allclose(out_bf16, ref, atol=5e-2, rtol=5e-2), err_bf16

    print("KERNEL_OK")
</pallas_src>

<mosaic_0001>
module attributes {stable_mosaic.version = 11 : i64} {
  func.func @attentional_propagation_kernel(%arg0: i32, %arg1: i32, %arg2: memref<1x16x32xf32, #tpu.memory_space<vmem>>, %arg3: memref<1x16x32xf32, #tpu.memory_space<vmem>>, %arg4: memref<1x32x8xf32, #tpu.memory_space<vmem>>, %arg5: memref<1x1x8xf32, #tpu.memory_space<vmem>>, %arg6: memref<1x32x8xf32, #tpu.memory_space<vmem>>, %arg7: memref<1x1x8xf32, #tpu.memory_space<vmem>>, %arg8: memref<1x32x8xf32, #tpu.memory_space<vmem>>, %arg9: memref<1x1x8xf32, #tpu.memory_space<vmem>>, %arg10: memref<1x8x32xf32, #tpu.memory_space<vmem>>, %arg11: memref<1x32xf32, #tpu.memory_space<vmem>>, %arg12: memref<32x64xf32, #tpu.memory_space<vmem>>, %arg13: memref<32x64xf32, #tpu.memory_space<vmem>>, %arg14: memref<1x64xf32, #tpu.memory_space<vmem>>, %arg15: memref<64x32xf32, #tpu.memory_space<vmem>>, %arg16: memref<1x32xf32, #tpu.memory_space<vmem>>, %arg17: memref<1x16x32xf32, #tpu.memory_space<vmem>>, %arg18: memref<16x32xf32, #tpu.memory_space<vmem>>) attributes {dimension_semantics = [#tpu.dimension_semantics<parallel>, #tpu.dimension_semantics<arbitrary>], iteration_bounds = array<i64: 2, 4>, scalar_prefetch = 0 : i64, scratch_operands = 1 : i64, tpu.core_type = #tpu.core_type<tc>, window_params = [{transform_indices = @transform_0, window_bounds = array<i64: 1, 16, 32>}, {transform_indices = @transform_1, window_bounds = array<i64: 1, 16, 32>}, {transform_indices = @transform_2, window_bounds = array<i64: 1, 32, 8>}, {transform_indices = @transform_3, window_bounds = array<i64: 1, 1, 8>}, {transform_indices = @transform_4, window_bounds = array<i64: 1, 32, 8>}, {transform_indices = @transform_5, window_bounds = array<i64: 1, 1, 8>}, {transform_indices = @transform_6, window_bounds = array<i64: 1, 32, 8>}, {transform_indices = @transform_7, window_bounds = array<i64: 1, 1, 8>}, {transform_indices = @transform_8, window_bounds = array<i64: 1, 8, 32>}, {pipeline_mode = #tpu.pipeline_mode<synchronous>, transform_indices = @transform_9, window_bounds = array<i64: 1, 32>}, {pipeline_mode = #tpu.pipeline_mode<synchronous>, transform_indices = @transform_10, window_bounds = array<i64: 32, 64>}, {pipeline_mode = #tpu.pipeline_mode<synchronous>, transform_indices = @transform_11, window_bounds = array<i64: 32, 64>}, {pipeline_mode = #tpu.pipeline_mode<synchronous>, transform_indices = @transform_12, window_bounds = array<i64: 1, 64>}, {pipeline_mode = #tpu.pipeline_mode<synchronous>, transform_indices = @transform_13, window_bounds = array<i64: 64, 32>}, {pipeline_mode = #tpu.pipeline_mode<synchronous>, transform_indices = @transform_14, window_bounds = array<i64: 1, 32>}, {transform_indices = @transform_15, window_bounds = array<i64: 1, 16, 32>}]} {
    %c0_i32 = arith.constant 0 : i32
    %0 = arith.cmpi eq, %arg1, %c0_i32 : i32
    %1 = arith.extui %0 : i1 to i32
    %c0_i32_0 = arith.constant 0 : i32
    %2 = arith.cmpi ne, %1, %c0_i32_0 : i32
    scf.if %2 {
      %cst_39 = arith.constant 0.000000e+00 : f32
      %49 = vector.broadcast %cst_39 : f32 to vector<16x32xf32>
      %c0_40 = arith.constant 0 : index
      %c0_41 = arith.constant 0 : index
      %50 = vector.load %arg18[%c0_40, %c0_41] : memref<16x32xf32, #tpu.memory_space<vmem>>, vector<16x32xf32>
      tpu.vector_store %arg18[%c0_40, %c0_41], %49 {strides = array<i32>} : memref<16x32xf32, #tpu.memory_space<vmem>>, vector<16x32xf32>,
    } else {
    }
    %c0 = arith.constant 0 : index
    %c0_1 = arith.constant 0 : index
    %c0_2 = arith.constant 0 : index
    %3 = vector.load %arg2[%c0, %c0_1, %c0_2] : memref<1x16x32xf32, #tpu.memory_space<vmem>>, vector<1x16x32xf32>
    %4 = vector.shape_cast %3 : vector<1x16x32xf32> to vector<16x32xf32>
    %c0_3 = arith.constant 0 : index
    %c0_4 = arith.constant 0 : index
    %c0_5 = arith.constant 0 : index
    %5 = vector.load %arg3[%c0_3, %c0_4, %c0_5] : memref<1x16x32xf32, #tpu.memory_space<vmem>>, vector<1x16x32xf32>
    %6 = vector.shape_cast %5 : vector<1x16x32xf32> to vector<16x32xf32>
    %c0_6 = arith.constant 0 : index
    %c0_7 = arith.constant 0 : index
    %c0_8 = arith.constant 0 : index
    %7 = vector.load %arg4[%c0_6, %c0_7, %c0_8] : memref<1x32x8xf32, #tpu.memory_space<vmem>>, vector<1x32x8xf32>
    %8 = vector.shape_cast %7 : vector<1x32x8xf32> to vector<32x8xf32>
    %cst = arith.constant dense<0.000000e+00> : vector<16x8xf32>
    %9 = tpu.matmul %4, %8, %cst {dimension_numbers = #tpu.dot_dimension_numbers<[1], [0], [0], [1], [0, 0, 1, 1], [], []>} : vector<16x32xf32>, vector<32x8xf32>, vector<16x8xf32> -> vector<16x8xf32>
    %c0_9 = arith.constant 0 : index
    %c0_10 = arith.constant 0 : index
    %c0_11 = arith.constant 0 : index
    %10 = vector.load %arg5[%c0_9, %c0_10, %c0_11] : memref<1x1x8xf32, #tpu.memory_space<vmem>>, vector<1x1x8xf32>
    %11 = vector.shape_cast %10 : vector<1x1x8xf32> to vector<1x8xf32>
    %12 = vector.broadcast %11 : vector<1x8xf32> to vector<16x8xf32>
    %13 = arith.addf %9, %12 : vector<16x8xf32>
    %c0_12 = arith.constant 0 : index
    %c0_13 = arith.constant 0 : index
    %c0_14 = arith.constant 0 : index
    %14 = vector.load %arg6[%c0_12, %c0_13, %c0_14] : memref<1x32x8xf32, #tpu.memory_space<vmem>>, vector<1x32x8xf32>
    %15 = vector.shape_cast %14 : vector<1x32x8xf32> to vector<32x8xf32>
    %cst_15 = arith.constant dense<0.000000e+00> : vector<16x8xf32>
    %16 = tpu.matmul %6, %15, %cst_15 {dimension_numbers = #tpu.dot_dimension_numbers<[1], [0], [0], [1], [0, 0, 1, 1], [], []>} : vector<16x32xf32>, vector<32x8xf32>, vector<16x8xf32> -> vector<16x8xf32>
    %c0_16 = arith.constant 0 : index
    %c0_17 = arith.constant 0 : index
    %c0_18 = arith.constant 0 : index
    %17 = vector.load %arg7[%c0_16, %c0_17, %c0_18] : memref<1x1x8xf32, #tpu.memory_space<vmem>>, vector<1x1x8xf32>
    %18 = vector.shape_cast %17 : vector<1x1x8xf32> to vector<1x8xf32>
    %19 = vector.broadcast %18 : vector<1x8xf32> to vector<16x8xf32>
    %20 = arith.addf %16, %19 : vector<16x8xf32>
    %c0_19 = arith.constant 0 : index
    %c0_20 = arith.constant 0 : index
    %c0_21 = arith.constant 0 : index
    %21 = vector.load %arg8[%c0_19, %c0_20, %c0_21] : memref<1x32x8xf32, #tpu.memory_space<vmem>>, vector<1x32x8xf32>
    %22 = vector.shape_cast %21 : vector<1x32x8xf32> to vector<32x8xf32>
    %cst_22 = arith.constant dense<0.000000e+00> : vector<16x8xf32>
    %23 = tpu.matmul %6, %22, %cst_22 {dimension_numbers = #tpu.dot_dimension_numbers<[1], [0], [0], [1], [0, 0, 1, 1], [], []>} : vector<16x32xf32>, vector<32x8xf32>, vector<16x8xf32> -> vector<16x8xf32>
    %c0_23 = arith.constant 0 : index
    %c0_24 = arith.constant 0 : index
    %c0_25 = arith.constant 0 : index
    %24 = vector.load %arg9[%c0_23, %c0_24, %c0_25] : memref<1x1x8xf32, #tpu.memory_space<vmem>>, vector<1x1x8xf32>
    %25 = vector.shape_cast %24 : vector<1x1x8xf32> to vector<1x8xf32>
    %26 = vector.broadcast %25 : vector<1x8xf32> to vector<16x8xf32>
    %27 = arith.addf %23, %26 : vector<16x8xf32>
    %cst_26 = arith.constant dense<0.000000e+00> : vector<16x16xf32>
    %28 = tpu.matmul %13, %20, %cst_26 {dimension_numbers = #tpu.dot_dimension_numbers<[1], [1], [0], [0], [0, 0, 1, 0], [], []>} : vector<16x8xf32>, vector<16x8xf32>, vector<16x16xf32> -> vector<16x16xf32>
    %cst_27 = arith.constant dense<0xFF800000> : vector<16xf32>
    %29 = vector.multi_reduction <maximumf>, %28, %cst_27 [1] : vector<16x16xf32> to vector<16xf32>
    %30 = vector.shape_cast %29 : vector<16xf32> to vector<16x1xf32>
    %31 = vector.broadcast %30 : vector<16x1xf32> to vector<16x16xf32>
    %32 = arith.subf %28, %31 : vector<16x16xf32>
    %33 = math.exp %32 : vector<16x16xf32>
    %cst_28 = arith.constant dense<0.000000e+00> : vector<16xf32>
    %34 = vector.multi_reduction <add>, %33, %cst_28 [1] : vector<16x16xf32> to vector<16xf32>
    %35 = vector.shape_cast %34 : vector<16xf32> to vector<16x1xf32>
    %cst_29 = arith.constant dense<0.000000e+00> : vector<16x8xf32>
    %36 = tpu.matmul %33, %27, %cst_29 {dimension_numbers = #tpu.dot_dimension_numbers<[1], [0], [0], [1], [0, 0, 1, 1], [], []>} : vector<16x16xf32>, vector<16x8xf32>, vector<16x8xf32> -> vector<16x8xf32>
    %37 = tpu.reciprocal %35 : vector<16x1xf32> -> vector<16x1xf32>
    %38 = vector.broadcast %37 : vector<16x1xf32> to vector<16x8xf32>
    %39 = arith.mulf %36, %38 : vector<16x8xf32>
    %c0_30 = arith.constant 0 : index
    %c0_31 = arith.constant 0 : index
    %40 = vector.load %arg18[%c0_30, %c0_31] : memref<16x32xf32, #tpu.memory_space<vmem>>, vector<16x32xf32>
    %c0_32 = arith.constant 0 : index
    %c0_33 = arith.constant 0 : index
    %c0_34 = arith.constant 0 : index
    %41 = vector.load %arg10[%c0_32, %c0_33, %c0_34] : memref<1x8x32xf32, #tpu.memory_space<vmem>>, vector<1x8x32xf32>
    %42 = vector.shape_cast %41 : vector<1x8x32xf32> to vector<8x32xf32>
    %cst_35 = arith.constant dense<0.000000e+00> : vector<16x32xf32>
    %43 = tpu.matmul %39, %42, %cst_35 {dimension_numbers = #tpu.dot_dimension_numbers<[1], [0], [0], [1], [0, 0, 1, 1], [], []>} : vector<16x8xf32>, vector<8x32xf32>, vector<16x32xf32> -> vector<16x32xf32>
    %44 = arith.addf %40, %43 : vector<16x32xf32>
    %c0_36 = arith.constant 0 : index
    %c0_37 = arith.constant 0 : index
    %45 = vector.load %arg18[%c0_36, %c0_37] : memref<16x32xf32, #tpu.memory_space<vmem>>, vector<16x32xf32>
    tpu.vector_store %arg18[%c0_36, %c0_37], %44 {strides = array<i32>} : memref<16x32xf32, #tpu.memory_space<vmem>>, vector<16x32xf32>,
    %c3_i32 = arith.constant 3 : i32
    %46 = arith.cmpi eq, %arg1, %c3_i32 : i32
    %47 = arith.extui %46 : i1 to i32
    %c0_i32_38 = arith.constant 0 : i32
    %48 = arith.cmpi ne, %47, %c0_i32_38 : i32
    scf.if %48 {
      %c0_39 = arith.constant 0 : index
      %c0_40 = arith.constant 0 : index
      %49 = vector.load %arg18[%c0_39, %c0_40] : memref<16x32xf32, #tpu.memory_space<vmem>>, vector<16x32xf32>
      %c0_41 = arith.constant 0 : index
      %c0_42 = arith.constant 0 : index
      %50 = vector.load %arg11[%c0_41, %c0_42] : memref<1x32xf32, #tpu.memory_space<vmem>>, vector<1x32xf32>
      %51 = vector.broadcast %50 : vector<1x32xf32> to vector<16x32xf32>
      %52 = arith.addf %49, %51 : vector<16x32xf32>
      %cst_43 = arith.constant dense<0.000000e+00> : vector<32xf32>
      %53 = vector.multi_reduction <add>, %52, %cst_43 [0] : vector<16x32xf32> to vector<32xf32>
      %54 = vector.shape_cast %53 : vector<32xf32> to vector<1x32xf32>
      %cst_44 = arith.constant 1.600000e+01 : f32
      %55 = vector.broadcast %cst_44 : f32 to vector<1x32xf32>
      %56 = arith.divf %54, %55 : vector<1x32xf32>
      %57 = vector.broadcast %56 : vector<1x32xf32> to vector<16x32xf32>
      %58 = arith.subf %52, %57 : vector<16x32xf32>
      %59 = arith.mulf %58, %58 : vector<16x32xf32>
      %cst_45 = arith.constant dense<0.000000e+00> : vector<32xf32>
      %60 = vector.multi_reduction <add>, %59, %cst_45 [0] : vector<16x32xf32> to vector<32xf32>
      %61 = vector.shape_cast %60 : vector<32xf32> to vector<1x32xf32>
      %cst_46 = arith.constant 1.600000e+01 : f32
      %62 = vector.broadcast %cst_46 : f32 to vector<1x32xf32>
      %63 = arith.divf %61, %62 : vector<1x32xf32>
      %64 = vector.broadcast %56 : vector<1x32xf32> to vector<16x32xf32>
      %65 = arith.subf %52, %64 : vector<16x32xf32>
      %cst_47 = arith.constant 9.99999974E-6 : f32
      %66 = vector.broadcast %cst_47 : f32 to vector<1x32xf32>
      %67 = arith.addf %63, %66 : vector<1x32xf32>
      %68 = math.rsqrt %67 : vector<1x32xf32>
      %69 = vector.broadcast %68 : vector<1x32xf32> to vector<16x32xf32>
      %70 = arith.mulf %65, %69 : vector<16x32xf32>
      %c0_48 = arith.constant 0 : index
      %c0_49 = arith.constant 0 : index
      %71 = vector.load %arg12[%c0_48, %c0_49] : memref<32x64xf32, #tpu.memory_space<vmem>>, vector<32x64xf32>
      %cst_50 = arith.constant dense<0.000000e+00> : vector<16x64xf32>
      %72 = tpu.matmul %4, %71, %cst_50 {dimension_numbers = #tpu.dot_dimension_numbers<[1], [0], [0], [1], [0, 0, 1, 1], [], []>} : vector<16x32xf32>, vector<32x64xf32>, vector<16x64xf32> -> vector<16x64xf32>
      %c0_51 = arith.constant 0 : index
      %c0_52 = arith.constant 0 : index
      %73 = vector.load %arg13[%c0_51, %c0_52] : memref<32x64xf32, #tpu.memory_space<vmem>>, vector<32x64xf32>
      %cst_53 = arith.constant dense<0.000000e+00> : vector<16x64xf32>
      %74 = tpu.matmul %70, %73, %cst_53 {dimension_numbers = #tpu.dot_dimension_numbers<[1], [0], [0], [1], [0, 0, 1, 1], [], []>} : vector<16x32xf32>, vector<32x64xf32>, vector<16x64xf32> -> vector<16x64xf32>
      %75 = arith.addf %72, %74 : vector<16x64xf32>
      %c0_54 = arith.constant 0 : index
      %c0_55 = arith.constant 0 : index
      %76 = vector.load %arg14[%c0_54, %c0_55] : memref<1x64xf32, #tpu.memory_space<vmem>>, vector<1x64xf32>
      %77 = vector.broadcast %76 : vector<1x64xf32> to vector<16x64xf32>
      %78 = arith.addf %75, %77 : vector<16x64xf32>
      %cst_56 = arith.constant dense<0.000000e+00> : vector<64xf32>
      %79 = vector.multi_reduction <add>, %78, %cst_56 [0] : vector<16x64xf32> to vector<64xf32>
      %80 = vector.shape_cast %79 : vector<64xf32> to vector<1x64xf32>
      %cst_57 = arith.constant 1.600000e+01 : f32
      %81 = vector.broadcast %cst_57 : f32 to vector<1x64xf32>
      %82 = arith.divf %80, %81 : vector<1x64xf32>
      %83 = vector.broadcast %82 : vector<1x64xf32> to vector<16x64xf32>
      %84 = arith.subf %78, %83 : vector<16x64xf32>
      %85 = arith.mulf %84, %84 : vector<16x64xf32>
      %cst_58 = arith.constant dense<0.000000e+00> : vector<64xf32>
      %86 = vector.multi_reduction <add>, %85, %cst_58 [0] : vector<16x64xf32> to vector<64xf32>
      %87 = vector.shape_cast %86 : vector<64xf32> to vector<1x64xf32>
      %cst_59 = arith.constant 1.600000e+01 : f32
      %88 = vector.broadcast %cst_59 : f32 to vector<1x64xf32>
      %89 = arith.divf %87, %88 : vector<1x64xf32>
      %90 = vector.broadcast %82 : vector<1x64xf32> to vector<16x64xf32>
      %91 = arith.subf %78, %90 : vector<16x64xf32>
      %cst_60 = arith.constant 9.99999974E-6 : f32
      %92 = vector.broadcast %cst_60 : f32 to vector<1x64xf32>
      %93 = arith.addf %89, %92 : vector<1x64xf32>
      %94 = math.rsqrt %93 : vector<1x64xf32>
      %95 = vector.broadcast %94 : vector<1x64xf32> to vector<16x64xf32>
      %96 = arith.mulf %91, %95 : vector<16x64xf32>
      %cst_61 = arith.constant 0.000000e+00 : f32
      %97 = vector.broadcast %cst_61 : f32 to vector<16x64xf32>
      %98 = arith.maximumf %96, %97 : vector<16x64xf32>
      %c0_62 = arith.constant 0 : index
      %c0_63 = arith.constant 0 : index
      %99 = vector.load %arg15[%c0_62, %c0_63] : memref<64x32xf32, #tpu.memory_space<vmem>>, vector<64x32xf32>
      %cst_64 = arith.constant dense<0.000000e+00> : vector<16x32xf32>
      %100 = tpu.matmul %98, %99, %cst_64 {dimension_numbers = #tpu.dot_dimension_numbers<[1], [0], [0], [1], [0, 0, 1, 1], [], []>} : vector<16x64xf32>, vector<64x32xf32>, vector<16x32xf32> -> vector<16x32xf32>
      %c0_65 = arith.constant 0 : index
      %c0_66 = arith.constant 0 : index
      %101 = vector.load %arg16[%c0_65, %c0_66] : memref<1x32xf32, #tpu.memory_space<vmem>>, vector<1x32xf32>
      %102 = vector.broadcast %101 : vector<1x32xf32> to vector<16x32xf32>
      %103 = arith.addf %100, %102 : vector<16x32xf32>
      %c0_67 = arith.constant 0 : index
      %c0_68 = arith.constant 0 : index
      %c0_69 = arith.constant 0 : index
      %104 = vector.load %arg17[%c0_67, %c0_68, %c0_69] : memref<1x16x32xf32, #tpu.memory_space<vmem>>, vector<1x16x32xf32>
      %105 = vector.shape_cast %104 : vector<1x16x32xf32> to vector<16x32xf32>
      %106 = vector.shape_cast %103 : vector<16x32xf32> to vector<1x16x32xf32>
      tpu.vector_store %arg17[%c0_67, %c0_68, %c0_69], %106 {strides = array<i32>} : memref<1x16x32xf32, #tpu.memory_space<vmem>>, vector<1x16x32xf32>,
    } else {
    }
    return
  }
  func.func @transform_0(%arg0: i32, %arg1: i32) -> (i32, i32, i32) {
    %c0_i32 = arith.constant 0 : i32
    %c0_i32_0 = arith.constant 0 : i32
    %c0_i32_1 = arith.constant 0 : i32
    return %arg0, %c0_i32, %c0_i32_0 : i32, i32, i32
  }
  func.func @transform_1(%arg0: i32, %arg1: i32) -> (i32, i32, i32) {
    %c0_i32 = arith.constant 0 : i32
    %c0_i32_0 = arith.constant 0 : i32
    %c0_i32_1 = arith.constant 0 : i32
    return %arg0, %c0_i32, %c0_i32_0 : i32, i32, i32
  }
  func.func @transform_2(%arg0: i32, %arg1: i32) -> (i32, i32, i32) {
    %c0_i32 = arith.constant 0 : i32
    %c0_i32_0 = arith.constant 0 : i32
    %c0_i32_1 = arith.constant 0 : i32
    return %arg1, %c0_i32, %c0_i32_0 : i32, i32, i32
  }
  func.func @transform_3(%arg0: i32, %arg1: i32) -> (i32, i32, i32) {
    %c0_i32 = arith.constant 0 : i32
    %c0_i32_0 = arith.constant 0 : i32
    %c0_i32_1 = arith.constant 0 : i32
    return %arg1, %c0_i32, %c0_i32_0 : i32, i32, i32
  }
  func.func @transform_4(%arg0: i32, %arg1: i32) -> (i32, i32, i32) {
    %c0_i32 = arith.constant 0 : i32
    %c0_i32_0 = arith.constant 0 : i32
    %c0_i32_1 = arith.constant 0 : i32
    return %arg1, %c0_i32, %c0_i32_0 : i32, i32, i32
  }
  func.func @transform_5(%arg0: i32, %arg1: i32) -> (i32, i32, i32) {
    %c0_i32 = arith.constant 0 : i32
    %c0_i32_0 = arith.constant 0 : i32
    %c0_i32_1 = arith.constant 0 : i32
    return %arg1, %c0_i32, %c0_i32_0 : i32, i32, i32
  }
  func.func @transform_6(%arg0: i32, %arg1: i32) -> (i32, i32, i32) {
    %c0_i32 = arith.constant 0 : i32
    %c0_i32_0 = arith.constant 0 : i32
    %c0_i32_1 = arith.constant 0 : i32
    return %arg1, %c0_i32, %c0_i32_0 : i32, i32, i32
  }
  func.func @transform_7(%arg0: i32, %arg1: i32) -> (i32, i32, i32) {
    %c0_i32 = arith.constant 0 : i32
    %c0_i32_0 = arith.constant 0 : i32
    %c0_i32_1 = arith.constant 0 : i32
    return %arg1, %c0_i32, %c0_i32_0 : i32, i32, i32
  }
  func.func @transform_8(%arg0: i32, %arg1: i32) -> (i32, i32, i32) {
    %c0_i32 = arith.constant 0 : i32
    %c0_i32_0 = arith.constant 0 : i32
    %c0_i32_1 = arith.constant 0 : i32
    return %arg1, %c0_i32, %c0_i32_0 : i32, i32, i32
  }
  func.func @transform_9(%arg0: i32, %arg1: i32) -> (i32, i32) {
    %c0_i32 = arith.constant 0 : i32
    %c0_i32_0 = arith.constant 0 : i32
    %c0_i32_1 = arith.constant 0 : i32
    return %c0_i32, %c0_i32_0 : i32, i32
  }
  func.func @transform_10(%arg0: i32, %arg1: i32) -> (i32, i32) {
    %c0_i32 = arith.constant 0 : i32
    %c0_i32_0 = arith.constant 0 : i32
    %c0_i32_1 = arith.constant 0 : i32
    return %c0_i32, %c0_i32_0 : i32, i32
  }
  func.func @transform_11(%arg0: i32, %arg1: i32) -> (i32, i32) {
    %c0_i32 = arith.constant 0 : i32
    %c0_i32_0 = arith.constant 0 : i32
    %c0_i32_1 = arith.constant 0 : i32
    return %c0_i32, %c0_i32_0 : i32, i32
  }
  func.func @transform_12(%arg0: i32, %arg1: i32) -> (i32, i32) {
    %c0_i32 = arith.constant 0 : i32
    %c0_i32_0 = arith.constant 0 : i32
    %c0_i32_1 = arith.constant 0 : i32
    return %c0_i32, %c0_i32_0 : i32, i32
  }
  func.func @transform_13(%arg0: i32, %arg1: i32) -> (i32, i32) {
    %c0_i32 = arith.constant 0 : i32
    %c0_i32_0 = arith.constant 0 : i32
    %c0_i32_1 = arith.constant 0 : i32
    return %c0_i32, %c0_i32_0 : i32, i32
  }
  func.func @transform_14(%arg0: i32, %arg1: i32) -> (i32, i32) {
    %c0_i32 = arith.constant 0 : i32
    %c0_i32_0 = arith.constant 0 : i32
    %c0_i32_1 = arith.constant 0 : i32
    return %c0_i32, %c0_i32_0 : i32, i32
  }
  func.func @transform_15(%arg0: i32, %arg1: i32) -> (i32, i32, i32) {
    %c0_i32 = arith.constant 0 : i32
    %c0_i32_0 = arith.constant 0 : i32
    %c0_i32_1 = arith.constant 0 : i32
    return %arg0, %c0_i32, %c0_i32_0 : i32, i32, i32
  }
}

</mosaic_0001>

<llo_original>
// kernel: tpu_custom_call.1
$region0: #{tpu_custom_call.1}
  #allocation0 [shape = 'u32[]', space=smem, size = 0x4, offset = 0x4, fixed_abs, tag = 'smem constant byte address 0x4 - core index']
  #allocation1 [shape = 'u32[144,128]{1,0:T(1,128)}', space=vmem, size = 0x12000, scoped, tag = 'internal scratch']
  #allocation2 [shape = 'f32[16,32]{1,0:T(8,128)}', space=vmem, size = 0x2000, scoped, tag = 'scratch operand']
  %s0 = inlined_call_operand.vmem [shape: f32[2,16,32], index: 0, kind: input, shape index: {}]
  %s1 = inlined_call_operand.vmem [shape: f32[2,16,32], index: 1, kind: input, shape index: {}]
  %s2 = inlined_call_operand.vmem [shape: f32[4,32,8], index: 2, kind: input, shape index: {}]
  %s3 = inlined_call_operand.vmem [shape: f32[4,1,8], index: 3, kind: input, shape index: {}]
  %s4 = inlined_call_operand.vmem [shape: f32[4,32,8], index: 4, kind: input, shape index: {}]
  %s5 = inlined_call_operand.vmem [shape: f32[4,1,8], index: 5, kind: input, shape index: {}]
  %s6 = inlined_call_operand.vmem [shape: f32[4,32,8], index: 6, kind: input, shape index: {}]
  %s7 = inlined_call_operand.vmem [shape: f32[4,1,8], index: 7, kind: input, shape index: {}]
  %s8 = inlined_call_operand.vmem [shape: f32[4,8,32], index: 8, kind: input, shape index: {}]
  %s9 = inlined_call_operand.vmem [shape: f32[1,32], index: 9, kind: input, shape index: {}]
  %s10 = inlined_call_operand.vmem [shape: f32[32,64], index: 10, kind: input, shape index: {}]
  %s11 = inlined_call_operand.vmem [shape: f32[32,64], index: 11, kind: input, shape index: {}]
  %s12 = inlined_call_operand.vmem [shape: f32[1,64], index: 12, kind: input, shape index: {}]
  %s13 = inlined_call_operand.vmem [shape: f32[64,32], index: 13, kind: input, shape index: {}]
  %s14 = inlined_call_operand.vmem [shape: f32[1,32], index: 14, kind: input, shape index: {}]
  %s15 = inlined_call_operand.hbm [shape: f32[2,16,32], index: 15, kind: output, shape index: {}]
  %s16 = sld [smem:[#allocation0]]
  $region101: #{tpu_custom_call.1} parent=0
    _
  %s18 = ssub.s32 1, %s16
  %s19 = scalar_select 0, %s18, %s16
  $region1: #{tpu_custom_call.1} parent=0
    #allocation3 [shape = 'u8[16384]{0}', space=vmem, size = 0x4000, scoped, tag = 'output window, operand 0']
    #allocation4 [shape = 's32[2]{0}', space=sflag, size = 0x8, scoped, tag = 'scoped memory for tpu_custom_call.1']
    %20 = vsyncpa [#allocation4], 0
    %s21 = scalar_lea.sflag [#allocation4], 1
    %22 = vsyncpa %s21, 0
    loop: start=0, step=1, limit=10
    $region2: #{tpu_custom_call.1} parent=1 // loop_pre_header
      _
    $region3: #{tpu_custom_call.1} parent=1 // loop_header
      %s24 = sphi 0, %s28
      %p25 = scmp.ge.s32.totalorder %s24, 10
      %s31 = sphi 0, %s43
      %s32 = sphi 0, %s39
      %s33 = sphi 0, %s31
      %s34 = sphi 0, %s32
      %s35 = sphi 0, %s33
      %s36 = sphi 0, %s34
      %s46 = sphi 0, %s48
      %s49 = sphi 0, %s46
      %s50 = sphi 0, %s49
      %s66 = sphi 0, %s50
      %s72 = sphi 0, %s74
      %s75 = sphi 0, %s72
      %s76 = sphi 0, %s75
      %s92 = sphi 0, %s76
      %s98 = sphi 0, %s100
      %s101 = sphi 0, %s98
      %s102 = sphi 0, %s101
      %s118 = sphi 0, %s102
      %s124 = sphi 0, %s126
      %s127 = sphi 0, %s124
      %s128 = sphi 0, %s127
      %s144 = sphi 0, %s128
      %s150 = sphi 0, %s152
      %s153 = sphi 0, %s150
      %s154 = sphi 0, %s153
      %s170 = sphi 0, %s154
      %s176 = sphi 0, %s178
      %s179 = sphi 0, %s176
      %s180 = sphi 0, %s179
      %s196 = sphi 0, %s180
      %s202 = sphi 0, %s204
      %s205 = sphi 0, %s202
      %s206 = sphi 0, %s205
      %s222 = sphi 0, %s206
      %s228 = sphi 0, %s230
      %s231 = sphi 0, %s228
      %s232 = sphi 0, %s231
      %s248 = sphi 0, %s232
      %s254 = sphi 0, %s256
      %s257 = sphi 0, %s254
      %s258 = sphi 0, %s257
      %s274 = sphi 0, %s258
      %s278 = sphi 0, %s278
      %s280 = sphi 0, %s278
      %s281 = sphi 0, %s280
      %s295 = sphi 0, %s281
      %s299 = sphi 0, %s299
      %s301 = sphi 0, %s299
      %s302 = sphi 0, %s301
      %s316 = sphi 0, %s302
      %s320 = sphi 0, %s320
      %s322 = sphi 0, %s320
      %s323 = sphi 0, %s322
      %s337 = sphi 0, %s323
      %s341 = sphi 0, %s341
      %s343 = sphi 0, %s341
      %s344 = sphi 0, %s343
      %s358 = sphi 0, %s344
      %s362 = sphi 0, %s362
      %s364 = sphi 0, %s362
      %s365 = sphi 0, %s364
      %s379 = sphi 0, %s365
      %s383 = sphi 0, %s383
      %s385 = sphi 0, %s383
      %s386 = sphi 0, %s385
      %s400 = sphi 0, %s386
      %s406 = sphi 0, %s408
      %s409 = sphi 0, %s406
      %s410 = sphi 0, %s409
      %s426 = sphi 0, %s410
    $region4: #{tpu_custom_call.1} parent=1 // loop_header_branch
      %27 = sbr.rel (%p25) target = $region8
    $region5: #{tpu_custom_call.1} parent=1 // loop_body
      %s29 = ssub.s32 %s24, 1
      %s30 = ssub.s32 %s24, 2
      %s37 = sadd.s32 1, %s32
      %p38 = scmp.ge.s32.totalorder %s37, 4
      %s39 = scalar_select %p38, 0, %s37
      %s40 = sadd.s32 1, %s31
      %s41 = scalar_select %p38, %s40, %s31
      %p42 = scmp.ge.s32.totalorder %s41, 2
      %s43 = scalar_select %p42, 0, %s41
      %s44 = ssub.s32 %s31, %s43
      %p45 = scmp.eq.s32.totalorder %s44, 0
      %s47 = sadd.s32 %s46, 1
      %s48 = scalar_select %p45, %s46, %s47
      %p51 = pneg %p45
      %p52 = scmp.eq.s32.totalorder %s24, 7
      %p53 = por %p51, %p52
      %p54 = scmp.ne.s32.totalorder %s46, %s49
      %p55 = scmp.eq.s32.totalorder %s24, 0
      %p56 = por %p54, %p55
      %p57 = scmp.ne.s32.totalorder %s46, %s49
      %p58 = scmp.eq.s32.totalorder %s29, 7
      %p59 = por %p57, %p58
      %p60 = scmp.ne.s32.totalorder %s49, %s50
      %p61 = scmp.eq.s32.totalorder %s29, 0
      %p62 = por %p60, %p61
      %p63 = scmp.ne.s32.totalorder %s49, %s50
      %p64 = scmp.eq.s32.totalorder %s30, 7
      %p65 = por %p63, %p64
      %p67 = scmp.ne.s32.totalorder %s50, %s66
      %p68 = scmp.eq.s32.totalorder %s30, 0
      %p69 = por %p67, %p68
      %s70 = ssub.s32 %s31, %s43
      %p71 = scmp.eq.s32.totalorder %s70, 0
      %s73 = sadd.s32 %s72, 1
      %s74 = scalar_select %p71, %s72, %s73
      %p77 = pneg %p71
      %p78 = scmp.eq.s32.totalorder %s24, 7
      %p79 = por %p77, %p78
      %p80 = scmp.ne.s32.totalorder %s72, %s75
      %p81 = scmp.eq.s32.totalorder %s24, 0
      %p82 = por %p80, %p81
      %p83 = scmp.ne.s32.totalorder %s72, %s75
      %p84 = scmp.eq.s32.totalorder %s29, 7
      %p85 = por %p83, %p84
      %p86 = scmp.ne.s32.totalorder %s75, %s76
      %p87 = scmp.eq.s32.totalorder %s29, 0
      %p88 = por %p86, %p87
      %p89 = scmp.ne.s32.totalorder %s75, %s76
      %p90 = scmp.eq.s32.totalorder %s30, 7
      %p91 = por %p89, %p90
      %p93 = scmp.ne.s32.totalorder %s76, %s92
      %p94 = scmp.eq.s32.totalorder %s30, 0
      %p95 = por %p93, %p94
      %s96 = ssub.s32 %s32, %s39
      %p97 = scmp.eq.s32.totalorder %s96, 0
      %s99 = sadd.s32 %s98, 1
      %s100 = scalar_select %p97, %s98, %s99
      %p103 = pneg %p97
      %p104 = scmp.eq.s32.totalorder %s24, 7
      %p105 = por %p103, %p104
      %p106 = scmp.ne.s32.totalorder %s98, %s101
      %p107 = scmp.eq.s32.totalorder %s24, 0
      %p108 = por %p106, %p107
      %p109 = scmp.ne.s32.totalorder %s98, %s101
      %p110 = scmp.eq.s32.totalorder %s29, 7
      %p111 = por %p109, %p110
      %p112 = scmp.ne.s32.totalorder %s101, %s102
      %p113 = scmp.eq.s32.totalorder %s29, 0
      %p114 = por %p112, %p113
      %p115 = scmp.ne.s32.totalorder %s101, %s102
      %p116 = scmp.eq.s32.totalorder %s30, 7
      %p117 = por %p115, %p116
      %p119 = scmp.ne.s32.totalorder %s102, %s118
      %p120 = scmp.eq.s32.totalorder %s30, 0
      %p121 = por %p119, %p120
      %s122 = ssub.s32 %s32, %s39
      %p123 = scmp.eq.s32.totalorder %s122, 0
      %s125 = sadd.s32 %s124, 1
      %s126 = scalar_select %p123, %s124, %s125
      %p129 = pneg %p123
      %p130 = scmp.eq.s32.totalorder %s24, 7
      %p131 = por %p129, %p130
      %p132 = scmp.ne.s32.totalorder %s124, %s127
      %p133 = scmp.eq.s32.totalorder %s24, 0
      %p134 = por %p132, %p133
      %p135 = scmp.ne.s32.totalorder %s124, %s127
      %p136 = scmp.eq.s32.totalorder %s29, 7
      %p137 = por %p135, %p136
      %p138 = scmp.ne.s32.totalorder %s127, %s128
      %p139 = scmp.eq.s32.totalorder %s29, 0
      %p140 = por %p138, %p139
      %p141 = scmp.ne.s32.totalorder %s127, %s128
      %p142 = scmp.eq.s32.totalorder %s30, 7
      %p143 = por %p141, %p142
      %p145 = scmp.ne.s32.totalorder %s128, %s144
      %p146 = scmp.eq.s32.totalorder %s30, 0
      %p147 = por %p145, %p146
      %s148 = ssub.s32 %s32, %s39
      %p149 = scmp.eq.s32.totalorder %s148, 0
      %s151 = sadd.s32 %s150, 1
      %s152 = scalar_select %p149, %s150, %s151
      %p155 = pneg %p149
      %p156 = scmp.eq.s32.totalorder %s24, 7
      %p157 = por %p155, %p156
      %p158 = scmp.ne.s32.totalorder %s150, %s153
      %p159 = scmp.eq.s32.totalorder %s24, 0
      %p160 = por %p158, %p159
      %p161 = scmp.ne.s32.totalorder %s150, %s153
      %p162 = scmp.eq.s32.totalorder %s29, 7
      %p163 = por %p161, %p162
      %p164 = scmp.ne.s32.totalorder %s153, %s154
      %p165 = scmp.eq.s32.totalorder %s29, 0
      %p166 = por %p164, %p165
      %p167 = scmp.ne.s32.totalorder %s153, %s154
      %p168 = scmp.eq.s32.totalorder %s30, 7
      %p169 = por %p167, %p168
      %p171 = scmp.ne.s32.totalorder %s154, %s170
      %p172 = scmp.eq.s32.totalorder %s30, 0
      %p173 = por %p171, %p172
      %s174 = ssub.s32 %s32, %s39
      %p175 = scmp.eq.s32.totalorder %s174, 0
      %s177 = sadd.s32 %s176, 1
      %s178 = scalar_select %p175, %s176, %s177
      %p181 = pneg %p175
      %p182 = scmp.eq.s32.totalorder %s24, 7
      %p183 = por %p181, %p182
      %p184 = scmp.ne.s32.totalorder %s176, %s179
      %p185 = scmp.eq.s32.totalorder %s24, 0
      %p186 = por %p184, %p185
      %p187 = scmp.ne.s32.totalorder %s176, %s179
      %p188 = scmp.eq.s32.totalorder %s29, 7
      %p189 = por %p187, %p188
      %p190 = scmp.ne.s32.totalorder %s179, %s180
      %p191 = scmp.eq.s32.totalorder %s29, 0
      %p192 = por %p190, %p191
      %p193 = scmp.ne.s32.totalorder %s179, %s180
      %p194 = scmp.eq.s32.totalorder %s30, 7
      %p195 = por %p193, %p194
      %p197 = scmp.ne.s32.totalorder %s180, %s196
      %p198 = scmp.eq.s32.totalorder %s30, 0
      %p199 = por %p197, %p198
      %s200 = ssub.s32 %s32, %s39
      %p201 = scmp.eq.s32.totalorder %s200, 0
      %s203 = sadd.s32 %s202, 1
      %s204 = scalar_select %p201, %s202, %s203
      %p207 = pneg %p201
      %p208 = scmp.eq.s32.totalorder %s24, 7
      %p209 = por %p207, %p208
      %p210 = scmp.ne.s32.totalorder %s202, %s205
      %p211 = scmp.eq.s32.totalorder %s24, 0
      %p212 = por %p210, %p211
      %p213 = scmp.ne.s32.totalorder %s202, %s205
      %p214 = scmp.eq.s32.totalorder %s29, 7
      %p215 = por %p213, %p214
      %p216 = scmp.ne.s32.totalorder %s205, %s206
      %p217 = scmp.eq.s32.totalorder %s29, 0
      %p218 = por %p216, %p217
      %p219 = scmp.ne.s32.totalorder %s205, %s206
      %p220 = scmp.eq.s32.totalorder %s30, 7
      %p221 = por %p219, %p220
      %p223 = scmp.ne.s32.totalorder %s206, %s222
      %p224 = scmp.eq.s32.totalorder %s30, 0
      %p225 = por %p223, %p224
      %s226 = ssub.s32 %s32, %s39
      %p227 = scmp.eq.s32.totalorder %s226, 0
      %s229 = sadd.s32 %s228, 1
      %s230 = scalar_select %p227, %s228, %s229
      %p233 = pneg %p227
      %p234 = scmp.eq.s32.totalorder %s24, 7
      %p235 = por %p233, %p234
      %p236 = scmp.ne.s32.totalorder %s228, %s231
      %p237 = scmp.eq.s32.totalorder %s24, 0
      %p238 = por %p236, %p237
      %p239 = scmp.ne.s32.totalorder %s228, %s231
      %p240 = scmp.eq.s32.totalorder %s29, 7
      %p241 = por %p239, %p240
      %p242 = scmp.ne.s32.totalorder %s231, %s232
      %p243 = scmp.eq.s32.totalorder %s29, 0
      %p244 = por %p242, %p243
      %p245 = scmp.ne.s32.totalorder %s231, %s232
      %p246 = scmp.eq.s32.totalorder %s30, 7
      %p247 = por %p245, %p246
      %p249 = scmp.ne.s32.totalorder %s232, %s248
      %p250 = scmp.eq.s32.totalorder %s30, 0
      %p251 = por %p249, %p250
      %s252 = ssub.s32 %s32, %s39
      %p253 = scmp.eq.s32.totalorder %s252, 0
      %s255 = sadd.s32 %s254, 1
      %s256 = scalar_select %p253, %s254, %s255
      %p259 = pneg %p253
      %p260 = scmp.eq.s32.totalorder %s24, 7
      %p261 = por %p259, %p260
      %p262 = scmp.ne.s32.totalorder %s254, %s257
      %p263 = scmp.eq.s32.totalorder %s24, 0
      %p264 = por %p262, %p263
      %p265 = scmp.ne.s32.totalorder %s254, %s257
      %p266 = scmp.eq.s32.totalorder %s29, 7
      %p267 = por %p265, %p266
      %p268 = scmp.ne.s32.totalorder %s257, %s258
      %p269 = scmp.eq.s32.totalorder %s29, 0
      %p270 = por %p268, %p269
      %p271 = scmp.ne.s32.totalorder %s257, %s258
      %p272 = scmp.eq.s32.totalorder %s30, 7
      %p273 = por %p271, %p272
      %p275 = scmp.ne.s32.totalorder %s258, %s274
      %p276 = scmp.eq.s32.totalorder %s30, 0
      %p277 = por %p275, %p276
      %s279 = sadd.s32 %s278, 1
      %p282 = scmp.eq.s32.totalorder %s24, 7
      %p283 = scmp.ne.s32.totalorder %s278, %s280
      %p284 = scmp.eq.s32.totalorder %s24, 0
      %p285 = por %p283, %p284
      %p286 = scmp.ne.s32.totalorder %s278, %s280
      %p287 = scmp.eq.s32.totalorder %s29, 7
      %p288 = por %p286, %p287
      %p289 = scmp.ne.s32.totalorder %s280, %s281
      %p290 = scmp.eq.s32.totalorder %s29, 0
      %p291 = por %p289, %p290
      %p292 = scmp.ne.s32.totalorder %s280, %s281
      %p293 = scmp.eq.s32.totalorder %s30, 7
      %p294 = por %p292, %p293
      %p296 = scmp.ne.s32.totalorder %s281, %s295
      %p297 = scmp.eq.s32.totalorder %s30, 0
      %p298 = por %p296, %p297
      %s300 = sadd.s32 %s299, 1
      %p303 = scmp.eq.s32.totalorder %s24, 7
      %p304 = scmp.ne.s32.totalorder %s299, %s301
      %p305 = scmp.eq.s32.totalorder %s24, 0
      %p306 = por %p304, %p305
      %p307 = scmp.ne.s32.totalorder %s299, %s301
      %p308 = scmp.eq.s32.totalorder %s29, 7
      %p309 = por %p307, %p308
      %p310 = scmp.ne.s32.totalorder %s301, %s302
      %p311 = scmp.eq.s32.totalorder %s29, 0
      %p312 = por %p310, %p311
      %p313 = scmp.ne.s32.totalorder %s301, %s302
      %p314 = scmp.eq.s32.totalorder %s30, 7
      %p315 = por %p313, %p314
      %p317 = scmp.ne.s32.totalorder %s302, %s316
      %p318 = scmp.eq.s32.totalorder %s30, 0
      %p319 = por %p317, %p318
      %s321 = sadd.s32 %s320, 1
      %p324 = scmp.eq.s32.totalorder %s24, 7
      %p325 = scmp.ne.s32.totalorder %s320, %s322
      %p326 = scmp.eq.s32.totalorder %s24, 0
      %p327 = por %p325, %p326
      %p328 = scmp.ne.s32.totalorder %s320, %s322
      %p329 = scmp.eq.s32.totalorder %s29, 7
      %p330 = por %p328, %p329
      %p331 = scmp.ne.s32.totalorder %s322, %s323
      %p332 = scmp.eq.s32.totalorder %s29, 0
      %p333 = por %p331, %p332
      %p334 = scmp.ne.s32.totalorder %s322, %s323
      %p335 = scmp.eq.s32.totalorder %s30, 7
      %p336 = por %p334, %p335
      %p338 = scmp.ne.s32.totalorder %s323, %s337
      %p339 = scmp.eq.s32.totalorder %s30, 0
      %p340 = por %p338, %p339
      %s342 = sadd.s32 %s341, 1
      %p345 = scmp.eq.s32.totalorder %s24, 7
      %p346 = scmp.ne.s32.totalorder %s341, %s343
      %p347 = scmp.eq.s32.totalorder %s24, 0
      %p348 = por %p346, %p347
      %p349 = scmp.ne.s32.totalorder %s341, %s343
      %p350 = scmp.eq.s32.totalorder %s29, 7
      %p351 = por %p349, %p350
      %p352 = scmp.ne.s32.totalorder %s343, %s344
      %p353 = scmp.eq.s32.totalorder %s29, 0
      %p354 = por %p352, %p353
      %p355 = scmp.ne.s32.totalorder %s343, %s344
      %p356 = scmp.eq.s32.totalorder %s30, 7
      %p357 = por %p355, %p356
      %p359 = scmp.ne.s32.totalorder %s344, %s358
      %p360 = scmp.eq.s32.totalorder %s30, 0
      %p361 = por %p359, %p360
      %s363 = sadd.s32 %s362, 1
      %p366 = scmp.eq.s32.totalorder %s24, 7
      %p367 = scmp.ne.s32.totalorder %s362, %s364
      %p368 = scmp.eq.s32.totalorder %s24, 0
      %p369 = por %p367, %p368
      %p370 = scmp.ne.s32.totalorder %s362, %s364
      %p371 = scmp.eq.s32.totalorder %s29, 7
      %p372 = por %p370, %p371
      %p373 = scmp.ne.s32.totalorder %s364, %s365
      %p374 = scmp.eq.s32.totalorder %s29, 0
      %p375 = por %p373, %p374
      %p376 = scmp.ne.s32.totalorder %s364, %s365
      %p377 = scmp.eq.s32.totalorder %s30, 7
      %p378 = por %p376, %p377
      %p380 = scmp.ne.s32.totalorder %s365, %s379
      %p381 = scmp.eq.s32.totalorder %s30, 0
      %p382 = por %p380, %p381
      %s384 = sadd.s32 %s383, 1
      %p387 = scmp.eq.s32.totalorder %s24, 7
      %p388 = scmp.ne.s32.totalorder %s383, %s385
      %p389 = scmp.eq.s32.totalorder %s24, 0
      %p390 = por %p388, %p389
      %p391 = scmp.ne.s32.totalorder %s383, %s385
      %p392 = scmp.eq.s32.totalorder %s29, 7
      %p393 = por %p391, %p392
      %p394 = scmp.ne.s32.totalorder %s385, %s386
      %p395 = scmp.eq.s32.totalorder %s29, 0
      %p396 = por %p394, %p395
      %p397 = scmp.ne.s32.totalorder %s385, %s386
      %p398 = scmp.eq.s32.totalorder %s30, 7
      %p399 = por %p397, %p398
      %p401 = scmp.ne.s32.totalorder %s386, %s400
      %p402 = scmp.eq.s32.totalorder %s30, 0
      %p403 = por %p401, %p402
      %s404 = ssub.s32 %s31, %s43
      %p405 = scmp.eq.s32.totalorder %s404, 0
      %s407 = sadd.s32 %s406, 1
      %s408 = scalar_select %p405, %s406, %s407
      %p411 = pneg %p405
      %p412 = scmp.eq.s32.totalorder %s24, 7
      %p413 = por %p411, %p412
      %p414 = scmp.ne.s32.totalorder %s406, %s409
      %p415 = scmp.eq.s32.totalorder %s24, 0
      %p416 = por %p414, %p415
      %p417 = scmp.ne.s32.totalorder %s406, %s409
      %p418 = scmp.eq.s32.totalorder %s29, 7
      %p419 = por %p417, %p418
      %p420 = scmp.ne.s32.totalorder %s409, %s410
      %p421 = scmp.eq.s32.totalorder %s29, 0
      %p422 = por %p420, %p421
      %p423 = scmp.ne.s32.totalorder %s409, %s410
      %p424 = scmp.eq.s32.totalorder %s30, 7
      %p425 = por %p423, %p424
      %p427 = scmp.ne.s32.totalorder %s410, %s426
      %p428 = scmp.eq.s32.totalorder %s30, 0
      %p429 = por %p427, %p428
      %p430 = scmp.le.s32.totalorder 1, %s24
      %p431 = scmp.lt.s32.totalorder %s24, 9
      %p432 = pnand %p430, %p431
      %p433 = pneg %p432
      // Predicated region
      $region9: #{tpu_custom_call.1} parent=5 // pred_check
        _
      $region10: #{tpu_custom_call.1} parent=5 // pred_check_branch
        %435 = sbr.rel (%p432) target = $region12
      $region11: #{tpu_custom_call.1} parent=5 // pred_region
        %s436 = ssub.s32 %s24, 1
        // Predicated region
        $region13: #{tpu_custom_call.1} parent=11 // pred_check
          %p437 = pneg %p291
        $region14: #{tpu_custom_call.1} parent=11 // pred_check_branch
          %439 = sbr.rel (%p437) target = $region16
        $region15: #{tpu_custom_call.1} parent=11 // pred_region
          _
        $region16: #{tpu_custom_call.1} parent=11 // pred_fallthru
          _
        // Predicated region
        $region17: #{tpu_custom_call.1} parent=11 // pred_check
          %p440 = pneg %p312
        $region18: #{tpu_custom_call.1} parent=11 // pred_check_branch
          %442 = sbr.rel (%p440) target = $region20
        $region19: #{tpu_custom_call.1} parent=11 // pred_region
          _
        $region20: #{tpu_custom_call.1} parent=11 // pred_fallthru
          _
        // Predicated region
        $region21: #{tpu_custom_call.1} parent=11 // pred_check
          %p443 = pneg %p333
        $region22: #{tpu_custom_call.1} parent=11 // pred_check_branch
          %445 = sbr.rel (%p443) target = $region24
        $region23: #{tpu_custom_call.1} parent=11 // pred_region
          _
        $region24: #{tpu_custom_call.1} parent=11 // pred_fallthru
          _
        // Predicated region
        $region25: #{tpu_custom_call.1} parent=11 // pred_check
          %p446 = pneg %p354
        $region26: #{tpu_custom_call.1} parent=11 // pred_check_branch
          %448 = sbr.rel (%p446) target = $region28
        $region27: #{tpu_custom_call.1} parent=11 // pred_region
          _
        $region28: #{tpu_custom_call.1} parent=11 // pred_fallthru
          _
        // Predicated region
        $region29: #{tpu_custom_call.1} parent=11 // pred_check
          %p449 = pneg %p375
        $region30: #{tpu_custom_call.1} parent=11 // pred_check_branch
          %451 = sbr.rel (%p449) target = $region32
        $region31: #{tpu_custom_call.1} parent=11 // pred_region
          _
        $region32: #{tpu_custom_call.1} parent=11 // pred_fallthru
          _
        // Predicated region
        $region33: #{tpu_custom_call.1} parent=11 // pred_check
          %p452 = pneg %p396
        $region34: #{tpu_custom_call.1} parent=11 // pred_check_branch
          %454 = sbr.rel (%p452) target = $region36
        $region35: #{tpu_custom_call.1} parent=11 // pred_region
          _
        $region36: #{tpu_custom_call.1} parent=11 // pred_fallthru
          _
      $region12: #{tpu_custom_call.1} parent=5 // pred_fallthru
        _
      %p455 = scmp.lt.s32.totalorder %s24, 8
      // Predicated region
      $region37: #{tpu_custom_call.1} parent=5 // pred_check
        %p456 = pneg %p455
      $region38: #{tpu_custom_call.1} parent=5 // pred_check_branch
        %458 = sbr.rel (%p456) target = $region40
      $region39: #{tpu_custom_call.1} parent=5 // pred_region
        // Predicated region
        $region41: #{tpu_custom_call.1} parent=39 // pred_check
          %p459 = pneg %p56
        $region42: #{tpu_custom_call.1} parent=39 // pred_check_branch
          %461 = sbr.rel (%p459) target = $region44
        $region43: #{tpu_custom_call.1} parent=39 // pred_region
          %p462 = scmp.lt.s32.totalorder %s31, 1
          %s463 = scalar_select %p462, %s31, 1
          %s464 = smul.addr %s463, 2
          %s465 = smul.addr %s464, 8
          %s466 = scalar_lea.vmem %s0, %s465
        $region44: #{tpu_custom_call.1} parent=39 // pred_fallthru
          _
        // Predicated region
        $region45: #{tpu_custom_call.1} parent=39 // pred_check
          %p467 = pneg %p82
        $region46: #{tpu_custom_call.1} parent=39 // pred_check_branch
          %469 = sbr.rel (%p467) target = $region48
        $region47: #{tpu_custom_call.1} parent=39 // pred_region
          %p470 = scmp.lt.s32.totalorder %s31, 1
          %s471 = scalar_select %p470, %s31, 1
          %s472 = smul.addr %s471, 2
          %s473 = smul.addr %s472, 8
          %s474 = scalar_lea.vmem %s1, %s473
        $region48: #{tpu_custom_call.1} parent=39 // pred_fallthru
          _
        // Predicated region
        $region49: #{tpu_custom_call.1} parent=39 // pred_check
          %p475 = pneg %p108
        $region50: #{tpu_custom_call.1} parent=39 // pred_check_branch
          %477 = sbr.rel (%p475) target = $region52
        $region51: #{tpu_custom_call.1} parent=39 // pred_region
          %p478 = scmp.lt.s32.totalorder %s32, 3
          %s479 = scalar_select %p478, %s32, 3
          %s480 = smul.addr %s479, 4
          %s481 = smul.addr %s480, 8
          %s482 = scalar_lea.vmem %s2, %s481
        $region52: #{tpu_custom_call.1} parent=39 // pred_fallthru
          _
        // Predicated region
        $region53: #{tpu_custom_call.1} parent=39 // pred_check
          %p483 = pneg %p134
        $region54: #{tpu_custom_call.1} parent=39 // pred_check_branch
          %485 = sbr.rel (%p483) target = $region56
        $region55: #{tpu_custom_call.1} parent=39 // pred_region
          %p486 = scmp.lt.s32.totalorder %s32, 3
          %s487 = scalar_select %p486, %s32, 3
          %s488 = scalar_lea.vmem %s3, %s487
        $region56: #{tpu_custom_call.1} parent=39 // pred_fallthru
          _
        // Predicated region
        $region57: #{tpu_custom_call.1} parent=39 // pred_check
          %p489 = pneg %p160
        $region58: #{tpu_custom_call.1} parent=39 // pred_check_branch
          %491 = sbr.rel (%p489) target = $region60
        $region59: #{tpu_custom_call.1} parent=39 // pred_region
          %p492 = scmp.lt.s32.totalorder %s32, 3
          %s493 = scalar_select %p492, %s32, 3
          %s494 = smul.addr %s493, 4
          %s495 = smul.addr %s494, 8
          %s496 = scalar_lea.vmem %s4, %s495
        $region60: #{tpu_custom_call.1} parent=39 // pred_fallthru
          _
        // Predicated region
        $region61: #{tpu_custom_call.1} parent=39 // pred_check
          %p497 = pneg %p186
        $region62: #{tpu_custom_call.1} parent=39 // pred_check_branch
          %499 = sbr.rel (%p497) target = $region64
        $region63: #{tpu_custom_call.1} parent=39 // pred_region
          %p500 = scmp.lt.s32.totalorder %s32, 3
          %s501 = scalar_select %p500, %s32, 3
          %s502 = scalar_lea.vmem %s5, %s501
        $region64: #{tpu_custom_call.1} parent=39 // pred_fallthru
          _
        // Predicated region
        $region65: #{tpu_custom_call.1} parent=39 // pred_check
          %p503 = pneg %p212
        $region66: #{tpu_custom_call.1} parent=39 // pred_check_branch
          %505 = sbr.rel (%p503) target = $region68
        $region67: #{tpu_custom_call.1} parent=39 // pred_region
          %p506 = scmp.lt.s32.totalorder %s32, 3
          %s507 = scalar_select %p506, %s32, 3
          %s508 = smul.addr %s507, 4
          %s509 = smul.addr %s508, 8
          %s510 = scalar_lea.vmem %s6, %s509
        $region68: #{tpu_custom_call.1} parent=39 // pred_fallthru
          _
        // Predicated region
        $region69: #{tpu_custom_call.1} parent=39 // pred_check
          %p511 = pneg %p238
        $region70: #{tpu_custom_call.1} parent=39 // pred_check_branch
          %513 = sbr.rel (%p511) target = $region72
        $region71: #{tpu_custom_call.1} parent=39 // pred_region
          %p514 = scmp.lt.s32.totalorder %s32, 3
          %s515 = scalar_select %p514, %s32, 3
          %s516 = scalar_lea.vmem %s7, %s515
        $region72: #{tpu_custom_call.1} parent=39 // pred_fallthru
          _
        // Predicated region
        $region73: #{tpu_custom_call.1} parent=39 // pred_check
          %p517 = pneg %p264
        $region74: #{tpu_custom_call.1} parent=39 // pred_check_branch
          %519 = sbr.rel (%p517) target = $region76
        $region75: #{tpu_custom_call.1} parent=39 // pred_region
          %p520 = scmp.lt.s32.totalorder %s32, 3
          %s521 = scalar_select %p520, %s32, 3
          %s522 = smul.addr %s521, 8
          %s523 = scalar_lea.vmem %s8, %s522
        $region76: #{tpu_custom_call.1} parent=39 // pred_fallthru
          _
      $region40: #{tpu_custom_call.1} parent=5 // pred_fallthru
        _
      %p524 = scmp.le.s32.totalorder 1, %s24
      %p525 = scmp.lt.s32.totalorder %s24, 9
      %p526 = pnand %p524, %p525
      %p527 = pneg %p526
      // Predicated region
      $region77: #{tpu_custom_call.1} parent=5 // pred_check
        _
      $region78: #{tpu_custom_call.1} parent=5 // pred_check_branch
        %529 = sbr.rel (%p526) target = $region80
      $region79: #{tpu_custom_call.1} parent=5 // pred_region
        %s530 = ssub.s32 %s24, 1
        %p531 = scmp.lt.s32.totalorder %s33, 1
        %s532 = scalar_select %p531, %s33, 1
        %s533 = smul.addr %s532, 2
        %s534 = smul.addr %s533, 8
        %s535 = scalar_lea.vmem %s0, %s534
        %p536 = pneg %p62
        %p537 = pneg %p59
        %p538 = scmp.lt.s32.totalorder %s33, 1
        %s539 = scalar_select %p538, %s33, 1
        %s540 = smul.addr %s539, 2
        %s541 = smul.addr %s540, 8
        %s542 = scalar_lea.vmem %s1, %s541
        %p543 = pneg %p88
        %p544 = pneg %p85
        %p545 = scmp.lt.s32.totalorder %s34, 3
        %s546 = scalar_select %p545, %s34, 3
        %s547 = smul.addr %s546, 4
        %s548 = smul.addr %s547, 8
        %s549 = scalar_lea.vmem %s2, %s548
        %p550 = pneg %p114
        %p551 = pneg %p111
        %p552 = scmp.lt.s32.totalorder %s34, 3
        %s553 = scalar_select %p552, %s34, 3
        %s554 = scalar_lea.vmem %s3, %s553
        %p555 = pneg %p140
        %p556 = pneg %p137
        %p557 = scmp.lt.s32.totalorder %s34, 3
        %s558 = scalar_select %p557, %s34, 3
        %s559 = smul.addr %s558, 4
        %s560 = smul.addr %s559, 8
        %s561 = scalar_lea.vmem %s4, %s560
        %p562 = pneg %p166
        %p563 = pneg %p163
        %p564 = scmp.lt.s32.totalorder %s34, 3
        %s565 = scalar_select %p564, %s34, 3
        %s566 = scalar_lea.vmem %s5, %s565
        %p567 = pneg %p192
        %p568 = pneg %p189
        %p569 = scmp.lt.s32.totalorder %s34, 3
        %s570 = scalar_select %p569, %s34, 3
        %s571 = smul.addr %s570, 4
        %s572 = smul.addr %s571, 8
        %s573 = scalar_lea.vmem %s6, %s572
        %p574 = pneg %p218
        %p575 = pneg %p215
        %p576 = scmp.lt.s32.totalorder %s34, 3
        %s577 = scalar_select %p576, %s34, 3
        %s578 = scalar_lea.vmem %s7, %s577
        %p579 = pneg %p244
        %p580 = pneg %p241
        %p581 = scmp.lt.s32.totalorder %s34, 3
        %s582 = scalar_select %p581, %s34, 3
        %s583 = smul.addr %s582, 8
        %s584 = scalar_lea.vmem %s8, %s583
        %p585 = pneg %p270
        %p586 = pneg %p267
        %p587 = pneg %p291
        %p588 = pneg %p288
        %p589 = pneg %p312
        %p590 = pneg %p309
        %p591 = pneg %p333
        %p592 = pneg %p330
        %p593 = pneg %p354
        %p594 = pneg %p351
        %p595 = pneg %p375
        %p596 = pneg %p372
        %p597 = pneg %p396
        %p598 = pneg %p393
        %p599 = pneg %p422
        %p600 = pneg %p419
        %s601 = sand.u32 %s409, 1
        %s602 = scalar_lea.sflag [#allocation4], %s601
        %s603 = sand.u32 %s409, 1
        %s604 = smul.addr %s603, 16
        %s605 = scalar_lea.vmem [#allocation3], %s604
        %p606 = scmp.lt.s32.totalorder %s33, 1
        %s607 = scalar_select %p606, %s33, 1
        %s608 = smul.addr %s607, 2
        %s609 = smul.addr %s608, 8
        %s610 = scalar_lea.vmem %s0, %s609
        %p611 = scmp.lt.s32.totalorder %s33, 1
        %s612 = scalar_select %p611, %s33, 1
        %s613 = smul.addr %s612, 2
        %s614 = smul.addr %s613, 8
        %s615 = scalar_lea.vmem %s1, %s614
        %p616 = scmp.lt.s32.totalorder %s34, 3
        %s617 = scalar_select %p616, %s34, 3
        %s618 = smul.addr %s617, 4
        %s619 = smul.addr %s618, 8
        %s620 = scalar_lea.vmem %s2, %s619
        %p621 = scmp.lt.s32.totalorder %s34, 3
        %s622 = scalar_select %p621, %s34, 3
        %s623 = scalar_lea.vmem %s3, %s622
        %p624 = scmp.lt.s32.totalorder %s34, 3
        %s625 = scalar_select %p624, %s34, 3
        %s626 = smul.addr %s625, 4
        %s627 = smul.addr %s626, 8
        %s628 = scalar_lea.vmem %s4, %s627
        %p629 = scmp.lt.s32.totalorder %s34, 3
        %s630 = scalar_select %p629, %s34, 3
        %s631 = scalar_lea.vmem %s5, %s630
        %p632 = scmp.lt.s32.totalorder %s34, 3
        %s633 = scalar_select %p632, %s34, 3
        %s634 = smul.addr %s633, 4
        %s635 = smul.addr %s634, 8
        %s636 = scalar_lea.vmem %s6, %s635
        %p637 = scmp.lt.s32.totalorder %s34, 3
        %s638 = scalar_select %p637, %s34, 3
        %s639 = scalar_lea.vmem %s7, %s638
        %p640 = scmp.lt.s32.totalorder %s34, 3
        %s641 = scalar_select %p640, %s34, 3
        %s642 = smul.addr %s641, 8
        %s643 = scalar_lea.vmem %s8, %s642
        %p644 = scmp.eq.s32.totalorder %s34, 0
        // Predicated region
        $region81: #{tpu_custom_call.1} parent=79 // pred_check
          %p645 = pneg %p644
        $region82: #{tpu_custom_call.1} parent=79 // pred_check_branch
          %647 = sbr.rel (%p645) target = $region84
        $region83: #{tpu_custom_call.1} parent=79 // pred_region
          %vm648 = vcmask 261120
          %649 = vst.msk [vmem:[#allocation2] sm:$0xff] %vm648, 0.0
          %650 = vst.msk [vmem:[#allocation2 + $0x8] sm:$0xff] %vm648, 0.0
        $region84: #{tpu_custom_call.1} parent=79 // pred_fallthru
          _
        %v651 = vld [vmem:[%s610] sm:$0xff]
        %v652 = vld [vmem:[%s610 + $0x8] sm:$0xff]
        %v653 = vld [vmem:[%s615] sm:$0xff]
        %v654 = vld [vmem:[%s615 + $0x8] sm:$0xff]
        %v655 = vld [vmem:[%s620] sm:$0xff]
        %v656 = vld [vmem:[%s620 + $0x8] sm:$0xff]
        %v657 = vld [vmem:[%s620 + $0x10] sm:$0xff]
        %v658 = vld [vmem:[%s620 + $0x18] sm:$0xff]
        %v659 = vld [vmem:[%s623] sm:$0x1]
        %v661 = vlaneseq
        %v662 = vshrl.u32 %v661, 7
        %v663 = vsub.s32 0, %v662
        %v664 = vrot.slane %v659, %v663
        %vm666 = vcmask 261120
        %v668 = vsel %vm666, %v651, 0
        %v671 = vsel %vm666, %v652, 0
        %673 = vmatprep.subr.mxu0 0.0
        %674 = vmatpush1.msra.mxu0 %v655
        %675 = vmatprep.subr.mxu0 0.0
        %676 = vmatpush1.msra.mxu0 %v656
        %677 = vmatprep.subr.mxu0 0.0
        %678 = vmatpush1.msra.mxu0 %v657
        %679 = vmatprep.subr.mxu0 0.0
        %680 = vmatpush1.msra.mxu0 %v658
        %681 = vmatprep.subr.mxu0 0.0
        %682 = vmatpush1.msra.mxu0 0.0
        %683 = vmatprep.subr.mxu0 0.0
        %684 = vmatpush1.msra.mxu0 0.0
        %685 = vmatprep.subr.mxu0 0.0
        %686 = vmatpush1.msra.mxu0 0.0
        %687 = vmatprep.subr.mxu0 0.0
        %688 = vmatpush1.msra.mxu0 0.0
        %689 = vmatprep.subr.mxu0 0.0
        %690 = vmatpush1.msra.mxu0 0.0
        %691 = vmatprep.subr.mxu0 0.0
        %692 = vmatpush1.msra.mxu0 0.0
        %693 = vmatprep.subr.mxu0 0.0
        %694 = vmatpush1.msra.mxu0 0.0
        %695 = vmatprep.subr.mxu0 0.0
        %696 = vmatpush1.msra.mxu0 0.0
        %697 = vmatprep.subr.mxu0 0.0
        %698 = vmatpush1.msra.mxu0 0.0
        %699 = vmatprep.subr.mxu0 0.0
        %700 = vmatpush1.msra.mxu0 0.0
        %701 = vmatprep.subr.mxu0 0.0
        %702 = vmatpush1.msra.mxu0 0.0
        %703 = vmatprep.subr.mxu0 0.0
        %704 = vmatpush1.msra.mxu0 0.0
        %705 = vmatprep.subr.mxu0 0.0
        %706 = vmatpush1.msra.mxu0 0.0
        %707 = vmatprep.subr.mxu0 0.0
        %708 = vmatpush1.msra.mxu0 0.0
        %709 = vmatprep.subr.mxu0 0.0
        %710 = vmatpush1.msra.mxu0 0.0
        %711 = vmatprep.subr.mxu0 0.0
        %712 = vmatpush1.msra.mxu0 0.0
        %713 = vmatprep.subr.mxu0 0.0
        %714 = vmatpush1.msra.mxu0 0.0
        %715 = vmatprep.subr.mxu0 0.0
        %716 = vmatpush1.msra.mxu0 0.0
        %717 = vmatprep.subr.mxu0 0.0
        %718 = vmatpush1.msra.mxu0 0.0
        %719 = vmatprep.subr.mxu0 0.0
        %720 = vmatpush1.msra.mxu0 0.0
        %721 = vmatprep.subr.mxu0 0.0
        %722 = vmatpush1.msra.mxu0 0.0
        %723 = vmatprep.subr.mxu0 0.0
        %724 = vmatpush1.msra.mxu0 0.0
        %725 = vmatprep.subr.mxu0 0.0
        %726 = vmatpush1.msra.mxu0 0.0
        %727 = vmatprep.subr.mxu0 0.0
        %728 = vmatpush1.msra.mxu0 0.0
        %729 = vmatprep.subr.mxu0 0.0
        %730 = vmatpush1.msra.mxu0 0.0
        %731 = vmatprep.subr.mxu0 0.0
        %732 = vmatpush1.msra.mxu0 0.0
        %733 = vmatprep.subr.mxu0 0.0
        %734 = vmatpush1.msra.mxu0 0.0
        %735 = vmatprep.subr.mxu0 0.0
        %736 = vmatpush1.msra.mxu0 0.0
        %737 = vmatprep.mubr.f32.mxu0 0.0
        %738 = vmatmul.mubr.f32.gmra.mrb[0].mxu0 %v668
        %v739 = vpop.f32.mrb[0].mxu0
        %v740 = vadd.f32 %v664, %v739
        %v741 = vpop.f32.mrb[0].mxu0
        %742 = vmatprep.mubr.f32.mxu0 0.0
        %743 = vmatmul.mubr.f32.gmra.mrb[0].mxu0 %v671
        %v744 = vpop.f32.mrb[0].mxu0
        %v745 = vadd.f32 %v664, %v744
        %v746 = vpop.f32.mrb[0].mxu0
        %747 = vdwg.mxu0
        %v748 = vld [vmem:[%s628] sm:$0xff]
        %v749 = vld [vmem:[%s628 + $0x8] sm:$0xff]
        %v750 = vld [vmem:[%s628 + $0x10] sm:$0xff]
        %v751 = vld [vmem:[%s628 + $0x18] sm:$0xff]
        %v752 = vld [vmem:[%s631] sm:$0x1]
        %v754 = vlaneseq
        %v755 = vshrl.u32 %v754, 7
        %v756 = vsub.s32 0, %v755
        %v757 = vrot.slane %v752, %v756
        %v760 = vsel %vm666, %v653, 0
        %v763 = vsel %vm666, %v654, 0
        %765 = vmatprep.subr.mxu0 0.0
        %766 = vmatpush1.msra.mxu0 %v748
        %767 = vmatprep.subr.mxu0 0.0
        %768 = vmatpush1.msra.mxu0 %v749
        %769 = vmatprep.subr.mxu0 0.0
        %770 = vmatpush1.msra.mxu0 %v750
        %771 = vmatprep.subr.mxu0 0.0
        %772 = vmatpush1.msra.mxu0 %v751
        %773 = vmatprep.subr.mxu0 0.0
        %774 = vmatpush1.msra.mxu0 0.0
        %775 = vmatprep.subr.mxu0 0.0
        %776 = vmatpush1.msra.mxu0 0.0
        %777 = vmatprep.subr.mxu0 0.0
        %778 = vmatpush1.msra.mxu0 0.0
        %779 = vmatprep.subr.mxu0 0.0
        %780 = vmatpush1.msra.mxu0 0.0
        %781 = vmatprep.subr.mxu0 0.0
        %782 = vmatpush1.msra.mxu0 0.0
        %783 = vmatprep.subr.mxu0 0.0
        %784 = vmatpush1.msra.mxu0 0.0
        %785 = vmatprep.subr.mxu0 0.0
        %786 = vmatpush1.msra.mxu0 0.0
        %787 = vmatprep.subr.mxu0 0.0
        %788 = vmatpush1.msra.mxu0 0.0
        %789 = vmatprep.subr.mxu0 0.0
        %790 = vmatpush1.msra.mxu0 0.0
        %791 = vmatprep.subr.mxu0 0.0
        %792 = vmatpush1.msra.mxu0 0.0
        %793 = vmatprep.subr.mxu0 0.0
        %794 = vmatpush1.msra.mxu0 0.0
        %795 = vmatprep.subr.mxu0 0.0
        %796 = vmatpush1.msra.mxu0 0.0
        %797 = vmatprep.subr.mxu0 0.0
        %798 = vmatpush1.msra.mxu0 0.0
        %799 = vmatprep.subr.mxu0 0.0
        %800 = vmatpush1.msra.mxu0 0.0
        %801 = vmatprep.subr.mxu0 0.0
        %802 = vmatpush1.msra.mxu0 0.0
        %803 = vmatprep.subr.mxu0 0.0
        %804 = vmatpush1.msra.mxu0 0.0
        %805 = vmatprep.subr.mxu0 0.0
        %806 = vmatpush1.msra.mxu0 0.0
        %807 = vmatprep.subr.mxu0 0.0
        %808 = vmatpush1.msra.mxu0 0.0
        %809 = vmatprep.subr.mxu0 0.0
        %810 = vmatpush1.msra.mxu0 0.0
        %811 = vmatprep.subr.mxu0 0.0
        %812 = vmatpush1.msra.mxu0 0.0
        %813 = vmatprep.subr.mxu0 0.0
        %814 = vmatpush1.msra.mxu0 0.0
        %815 = vmatprep.subr.mxu0 0.0
        %816 = vmatpush1.msra.mxu0 0.0
        %817 = vmatprep.subr.mxu0 0.0
        %818 = vmatpush1.msra.mxu0 0.0
        %819 = vmatprep.subr.mxu0 0.0
        %820 = vmatpush1.msra.mxu0 0.0
        %821 = vmatprep.subr.mxu0 0.0
        %822 = vmatpush1.msra.mxu0 0.0
        %823 = vmatprep.subr.mxu0 0.0
        %824 = vmatpush1.msra.mxu0 0.0
        %825 = vmatprep.subr.mxu0 0.0
        %826 = vmatpush1.msra.mxu0 0.0
        %827 = vmatprep.subr.mxu0 0.0
        %828 = vmatpush1.msra.mxu0 0.0
        %829 = vmatprep.mubr.f32.mxu0 0.0
        %830 = vmatmul.mubr.f32.gmra.mrb[0].mxu0 %v760
        %v831 = vpop.f32.mrb[0].mxu0
        %v832 = vadd.f32 %v757, %v831
        %v833 = vpop.f32.mrb[0].mxu0
        %834 = vmatprep.mubr.f32.mxu0 0.0
        %835 = vmatmul.mubr.f32.gmra.mrb[0].mxu0 %v763
        %v836 = vpop.f32.mrb[0].mxu0
        %v837 = vadd.f32 %v757, %v836
        %v838 = vpop.f32.mrb[0].mxu0
        %839 = vdwg.mxu0
        %v840 = vld [vmem:[%s636] sm:$0xff]
        %v841 = vld [vmem:[%s636 + $0x8] sm:$0xff]
        %v842 = vld [vmem:[%s636 + $0x10] sm:$0xff]
        %v843 = vld [vmem:[%s636 + $0x18] sm:$0xff]
        %v844 = vld [vmem:[%s639] sm:$0x1]
        %v846 = vlaneseq
        %v847 = vshrl.u32 %v846, 7
        %v848 = vsub.s32 0, %v847
        %v849 = vrot.slane %v844, %v848
        %851 = vmatprep.subr.mxu0 0.0
        %852 = vmatpush1.msra.mxu0 %v840
        %853 = vmatprep.subr.mxu0 0.0
        %854 = vmatpush1.msra.mxu0 %v841
        %855 = vmatprep.subr.mxu0 0.0
        %856 = vmatpush1.msra.mxu0 %v842
        %857 = vmatprep.subr.mxu0 0.0
        %858 = vmatpush1.msra.mxu0 %v843
        %859 = vmatprep.subr.mxu0 0.0
        %860 = vmatpush1.msra.mxu0 0.0
        %861 = vmatprep.subr.mxu0 0.0
        %862 = vmatpush1.msra.mxu0 0.0
        %863 = vmatprep.subr.mxu0 0.0
        %864 = vmatpush1.msra.mxu0 0.0
        %865 = vmatprep.subr.mxu0 0.0
        %866 = vmatpush1.msra.mxu0 0.0
        %867 = vmatprep.subr.mxu0 0.0
        %868 = vmatpush1.msra.mxu0 0.0
        %869 = vmatprep.subr.mxu0 0.0
        %870 = vmatpush1.msra.mxu0 0.0
        %871 = vmatprep.subr.mxu0 0.0
        %872 = vmatpush1.msra.mxu0 0.0
        %873 = vmatprep.subr.mxu0 0.0
        %874 = vmatpush1.msra.mxu0 0.0
        %875 = vmatprep.subr.mxu0 0.0
        %876 = vmatpush1.msra.mxu0 0.0
        %877 = vmatprep.subr.mxu0 0.0
        %878 = vmatpush1.msra.mxu0 0.0
        %879 = vmatprep.subr.mxu0 0.0
        %880 = vmatpush1.msra.mxu0 0.0
        %881 = vmatprep.subr.mxu0 0.0
        %882 = vmatpush1.msra.mxu0 0.0
        %883 = vmatprep.subr.mxu0 0.0
        %884 = vmatpush1.msra.mxu0 0.0
        %885 = vmatprep.subr.mxu0 0.0
        %886 = vmatpush1.msra.mxu0 0.0
        %887 = vmatprep.subr.mxu0 0.0
        %888 = vmatpush1.msra.mxu0 0.0
        %889 = vmatprep.subr.mxu0 0.0
        %890 = vmatpush1.msra.mxu0 0.0
        %891 = vmatprep.subr.mxu0 0.0
        %892 = vmatpush1.msra.mxu0 0.0
        %893 = vmatprep.subr.mxu0 0.0
        %894 = vmatpush1.msra.mxu0 0.0
        %895 = vmatprep.subr.mxu0 0.0
        %896 = vmatpush1.msra.mxu0 0.0
        %897 = vmatprep.subr.mxu0 0.0
        %898 = vmatpush1.msra.mxu0 0.0
        %899 = vmatprep.subr.mxu0 0.0
        %900 = vmatpush1.msra.mxu0 0.0
        %901 = vmatprep.subr.mxu0 0.0
        %902 = vmatpush1.msra.mxu0 0.0
        %903 = vmatprep.subr.mxu0 0.0
        %904 = vmatpush1.msra.mxu0 0.0
        %905 = vmatprep.subr.mxu0 0.0
        %906 = vmatpush1.msra.mxu0 0.0
        %907 = vmatprep.subr.mxu0 0.0
        %908 = vmatpush1.msra.mxu0 0.0
        %909 = vmatprep.subr.mxu0 0.0
        %910 = vmatpush1.msra.mxu0 0.0
        %911 = vmatprep.subr.mxu0 0.0
        %912 = vmatpush1.msra.mxu0 0.0
        %913 = vmatprep.subr.mxu0 0.0
        %914 = vmatpush1.msra.mxu0 0.0
        %915 = vmatprep.mubr.f32.mxu0 0.0
        %916 = vmatmul.mubr.f32.gmra.mrb[0].mxu0 %v760
        %v917 = vpop.f32.mrb[0].mxu0
        %v918 = vadd.f32 %v849, %v917
        %v919 = vpop.f32.mrb[0].mxu0
        %920 = vmatprep.mubr.f32.mxu0 0.0
        %921 = vmatmul.mubr.f32.gmra.mrb[0].mxu0 %v763
        %v922 = vpop.f32.mrb[0].mxu0
        %v923 = vadd.f32 %v849, %v922
        %v924 = vpop.f32.mrb[0].mxu0
        %925 = vdwg.mxu0
        %vm926 = vcmask 64512
        %v928 = vsel %vm926, %v740, 0
        %v931 = vsel %vm926, %v745, 0
        %v934 = vsel %vm926, %v832, 0
        %v937 = vsel %vm926, %v837, 0
        %939 = vmatprep.subr.mxu0 0.0
        %940 = vmatpush1.xpose.msra.mxu0 %v934
        %941 = vmatprep.subr.mxu0 0.0
        %942 = vmatpush1.xpose.msra.mxu0 %v937
        %943 = vmatprep.subr.mxu0 0.0
        %944 = vmatpush1.xpose.msra.mxu0 0.0
        %945 = vmatprep.subr.mxu0 0.0
        %946 = vmatpush1.xpose.msra.mxu0 0.0
        %947 = vmatprep.subr.mxu0 0.0
        %948 = vmatpush1.xpose.msra.mxu0 0.0
        %949 = vmatprep.subr.mxu0 0.0
        %950 = vmatpush1.xpose.msra.mxu0 0.0
        %951 = vmatprep.subr.mxu0 0.0
        %952 = vmatpush1.xpose.msra.mxu0 0.0
        %953 = vmatprep.subr.mxu0 0.0
        %954 = vmatpush1.xpose.msra.mxu0 0.0
        %955 = vmatprep.subr.mxu0 0.0
        %956 = vmatpush1.xpose.msra.mxu0 0.0
        %957 = vmatprep.subr.mxu0 0.0
        %958 = vmatpush1.xpose.msra.mxu0 0.0
        %959 = vmatprep.subr.mxu0 0.0
        %960 = vmatpush1.xpose.msra.mxu0 0.0
        %961 = vmatprep.subr.mxu0 0.0
        %962 = vmatpush1.xpose.msra.mxu0 0.0
        %963 = vmatprep.subr.mxu0 0.0
        %964 = vmatpush1.xpose.msra.mxu0 0.0
        %965 = vmatprep.subr.mxu0 0.0
        %966 = vmatpush1.xpose.msra.mxu0 0.0
        %967 = vmatprep.subr.mxu0 0.0
        %968 = vmatpush1.xpose.msra.mxu0 0.0
        %969 = vmatprep.subr.mxu0 0.0
        %970 = vmatpush1.xpose.msra.mxu0 0.0
        %971 = vmatprep.subr.mxu0 0.0
        %972 = vmatpush1.xpose.msra.mxu0 0.0
        %973 = vmatprep.subr.mxu0 0.0
        %974 = vmatpush1.xpose.msra.mxu0 0.0
        %975 = vmatprep.subr.mxu0 0.0
        %976 = vmatpush1.xpose.msra.mxu0 0.0
        %977 = vmatprep.subr.mxu0 0.0
        %978 = vmatpush1.xpose.msra.mxu0 0.0
        %979 = vmatprep.subr.mxu0 0.0
        %980 = vmatpush1.xpose.msra.mxu0 0.0
        %981 = vmatprep.subr.mxu0 0.0
        %982 = vmatpush1.xpose.msra.mxu0 0.0
        %983 = vmatprep.subr.mxu0 0.0
        %984 = vmatpush1.xpose.msra.mxu0 0.0
        %985 = vmatprep.subr.mxu0 0.0
        %986 = vmatpush1.xpose.msra.mxu0 0.0
        %987 = vmatprep.subr.mxu0 0.0
        %988 = vmatpush1.xpose.msra.mxu0 0.0
        %989 = vmatprep.subr.mxu0 0.0
        %990 = vmatpush1.xpose.msra.mxu0 0.0
        %991 = vmatprep.subr.mxu0 0.0
        %992 = vmatpush1.xpose.msra.mxu0 0.0
        %993 = vmatprep.subr.mxu0 0.0
        %994 = vmatpush1.xpose.msra.mxu0 0.0
        %995 = vmatprep.subr.mxu0 0.0
        %996 = vmatpush1.xpose.msra.mxu0 0.0
        %997 = vmatprep.subr.mxu0 0.0
        %998 = vmatpush1.xpose.msra.mxu0 0.0
        %999 = vmatprep.subr.mxu0 0.0
        %1000 = vmatpush1.xpose.msra.mxu0 0.0
        %1001 = vmatprep.subr.mxu0 0.0
        %1002 = vmatpush1.xpose.msra.mxu0 0.0
        %1003 = vmatprep.mubr.f32.mxu0 0.0
        %1004 = vmatmul.mubr.f32.gmra.mrb[0].mxu0 %v928
        %v1005 = vpop.f32.mrb[0].mxu0
        %v1006 = vadd.f32 0.0, %v1005
        %v1007 = vpop.f32.mrb[0].mxu0
        %1008 = vmatprep.mubr.f32.mxu0 0.0
        %1009 = vmatmul.mubr.f32.gmra.mrb[0].mxu0 %v931
        %v1010 = vpop.f32.mrb[0].mxu0
        %v1011 = vadd.f32 0.0, %v1010
        %v1012 = vpop.f32.mrb[0].mxu0
        %1013 = vdwg.mxu0
        %vm1014 = vcmask 130048
        %v1015 = vsel %vm1014, %v1006, -inf
        %1016 = vmax.xlane.f32.xlu0 %v1015
        %v1017 = vpop.xlane.xlu0 %1016
        %v1018 = vsel %vm1014, %v1011, -inf
        %1019 = vmax.xlane.f32.xlu0 %v1018
        %v1020 = vpop.xlane.xlu0 %1019
        %v1021 = vsub.f32 %v1006, %v1017
        %v1022 = vsub.f32 %v1011, %v1020
        %v1023 = vmul.f32 %v1021, 1.442695
        %v1024 = vpow.pop %v1023
        %v1025 = vmul.f32 %v1022, 1.442695
        %v1026 = vpow.pop %v1025
        %v1027 = vsel %vm1014, %v1024, 0.0
        %1028 = vadd.xlane.f32.xlu0 %v1027
        %v1029 = vpop.xlane.xlu0 %1028
        %v1030 = vsel %vm1014, %v1026, 0.0
        %1031 = vadd.xlane.f32.xlu0 %v1030
        %v1032 = vpop.xlane.xlu0 %1031
        %v1034 = vsel %vm1014, %v1024, 0
        %v1037 = vsel %vm1014, %v1026, 0
        %1039 = vmatprep.subr.mxu0 0.0
        %1040 = vmatpush1.msra.mxu0 %v918
        %1041 = vmatprep.subr.mxu0 0.0
        %1042 = vmatpush1.msra.mxu0 %v923
        %1043 = vmatprep.subr.mxu0 0.0
        %1044 = vmatpush1.msra.mxu0 0.0
        %1045 = vmatprep.subr.mxu0 0.0
        %1046 = vmatpush1.msra.mxu0 0.0
        %1047 = vmatprep.subr.mxu0 0.0
        %1048 = vmatpush1.msra.mxu0 0.0
        %1049 = vmatprep.subr.mxu0 0.0
        %1050 = vmatpush1.msra.mxu0 0.0
        %1051 = vmatprep.subr.mxu0 0.0
        %1052 = vmatpush1.msra.mxu0 0.0
        %1053 = vmatprep.subr.mxu0 0.0
        %1054 = vmatpush1.msra.mxu0 0.0
        %1055 = vmatprep.subr.mxu0 0.0
        %1056 = vmatpush1.msra.mxu0 0.0
        %1057 = vmatprep.subr.mxu0 0.0
        %1058 = vmatpush1.msra.mxu0 0.0
        %1059 = vmatprep.subr.mxu0 0.0
        %1060 = vmatpush1.msra.mxu0 0.0
        %1061 = vmatprep.subr.mxu0 0.0
        %1062 = vmatpush1.msra.mxu0 0.0
        %1063 = vmatprep.subr.mxu0 0.0
        %1064 = vmatpush1.msra.mxu0 0.0
        %1065 = vmatprep.subr.mxu0 0.0
        %1066 = vmatpush1.msra.mxu0 0.0
        %1067 = vmatprep.subr.mxu0 0.0
        %1068 = vmatpush1.msra.mxu0 0.0
        %1069 = vmatprep.subr.mxu0 0.0
        %1070 = vmatpush1.msra.mxu0 0.0
        %1071 = vmatprep.subr.mxu0 0.0
        %1072 = vmatpush1.msra.mxu0 0.0
        %1073 = vmatprep.subr.mxu0 0.0
        %1074 = vmatpush1.msra.mxu0 0.0
        %1075 = vmatprep.subr.mxu0 0.0
        %1076 = vmatpush1.msra.mxu0 0.0
        %1077 = vmatprep.subr.mxu0 0.0
        %1078 = vmatpush1.msra.mxu0 0.0
        %1079 = vmatprep.subr.mxu0 0.0
        %1080 = vmatpush1.msra.mxu0 0.0
        %1081 = vmatprep.subr.mxu0 0.0
        %1082 = vmatpush1.msra.mxu0 0.0
        %1083 = vmatprep.subr.mxu0 0.0
        %1084 = vmatpush1.msra.mxu0 0.0
        %1085 = vmatprep.subr.mxu0 0.0
        %1086 = vmatpush1.msra.mxu0 0.0
        %1087 = vmatprep.subr.mxu0 0.0
        %1088 = vmatpush1.msra.mxu0 0.0
        %1089 = vmatprep.subr.mxu0 0.0
        %1090 = vmatpush1.msra.mxu0 0.0
        %1091 = vmatprep.subr.mxu0 0.0
        %1092 = vmatpush1.msra.mxu0 0.0
        %1093 = vmatprep.subr.mxu0 0.0
        %1094 = vmatpush1.msra.mxu0 0.0
        %1095 = vmatprep.subr.mxu0 0.0
        %1096 = vmatpush1.msra.mxu0 0.0
        %1097 = vmatprep.subr.mxu0 0.0
        %1098 = vmatpush1.msra.mxu0 0.0
        %1099 = vmatprep.subr.mxu0 0.0
        %1100 = vmatpush1.msra.mxu0 0.0
        %1101 = vmatprep.subr.mxu0 0.0
        %1102 = vmatpush1.msra.mxu0 0.0
        %1103 = vmatprep.mubr.f32.mxu0 0.0
        %1104 = vmatmul.mubr.f32.gmra.mrb[0].mxu0 %v1034
        %v1105 = vpop.f32.mrb[0].mxu0
        %v1106 = vadd.f32 0.0, %v1105
        %v1107 = vpop.f32.mrb[0].mxu0
        %1108 = vmatprep.mubr.f32.mxu0 0.0
        %1109 = vmatmul.mubr.f32.gmra.mrb[0].mxu0 %v1037
        %v1110 = vpop.f32.mrb[0].mxu0
        %v1111 = vadd.f32 0.0, %v1110
        %v1112 = vpop.f32.mrb[0].mxu0
        %1113 = vdwg.mxu0
        %v1114 = vrcp.pop %v1029
        %v1115 = vrcp.pop %v1032
        %v1116 = vmul.f32 %v1106, %v1114
        %v1117 = vmul.f32 %v1111, %v1115
        %v1118 = vld [vmem:[#allocation2] sm:$0xff]
        %v1119 = vld [vmem:[#allocation2 + $0x8] sm:$0xff]
        %v1120 = vld [vmem:[%s643] sm:$0xff]
        %v1122 = vsel %vm926, %v1116, 0
        %v1125 = vsel %vm926, %v1117, 0
        %1127 = vmatprep.subr.mxu0 0.0
        %1128 = vmatpush1.msra.mxu0 %v1120
        %1129 = vmatprep.subr.mxu0 0.0
        %1130 = vmatpush1.msra.mxu0 0.0
        %1131 = vmatprep.subr.mxu0 0.0
        %1132 = vmatpush1.msra.mxu0 0.0
        %1133 = vmatprep.subr.mxu0 0.0
        %1134 = vmatpush1.msra.mxu0 0.0
        %1135 = vmatprep.subr.mxu0 0.0
        %1136 = vmatpush1.msra.mxu0 0.0
        %1137 = vmatprep.subr.mxu0 0.0
        %1138 = vmatpush1.msra.mxu0 0.0
        %1139 = vmatprep.subr.mxu0 0.0
        %1140 = vmatpush1.msra.mxu0 0.0
        %1141 = vmatprep.subr.mxu0 0.0
        %1142 = vmatpush1.msra.mxu0 0.0
        %1143 = vmatprep.subr.mxu0 0.0
        %1144 = vmatpush1.msra.mxu0 0.0
        %1145 = vmatprep.subr.mxu0 0.0
        %1146 = vmatpush1.msra.mxu0 0.0
        %1147 = vmatprep.subr.mxu0 0.0
        %1148 = vmatpush1.msra.mxu0 0.0
        %1149 = vmatprep.subr.mxu0 0.0
        %1150 = vmatpush1.msra.mxu0 0.0
        %1151 = vmatprep.subr.mxu0 0.0
        %1152 = vmatpush1.msra.mxu0 0.0
        %1153 = vmatprep.subr.mxu0 0.0
        %1154 = vmatpush1.msra.mxu0 0.0
        %1155 = vmatprep.subr.mxu0 0.0
        %1156 = vmatpush1.msra.mxu0 0.0
        %1157 = vmatprep.subr.mxu0 0.0
        %1158 = vmatpush1.msra.mxu0 0.0
        %1159 = vmatprep.subr.mxu0 0.0
        %1160 = vmatpush1.msra.mxu0 0.0
        %1161 = vmatprep.subr.mxu0 0.0
        %1162 = vmatpush1.msra.mxu0 0.0
        %1163 = vmatprep.subr.mxu0 0.0
        %1164 = vmatpush1.msra.mxu0 0.0
        %1165 = vmatprep.subr.mxu0 0.0
        %1166 = vmatpush1.msra.mxu0 0.0
        %1167 = vmatprep.subr.mxu0 0.0
        %1168 = vmatpush1.msra.mxu0 0.0
        %1169 = vmatprep.subr.mxu0 0.0
        %1170 = vmatpush1.msra.mxu0 0.0
        %1171 = vmatprep.subr.mxu0 0.0
        %1172 = vmatpush1.msra.mxu0 0.0
        %1173 = vmatprep.subr.mxu0 0.0
        %1174 = vmatpush1.msra.mxu0 0.0
        %1175 = vmatprep.subr.mxu0 0.0
        %1176 = vmatpush1.msra.mxu0 0.0
        %1177 = vmatprep.subr.mxu0 0.0
        %1178 = vmatpush1.msra.mxu0 0.0
        %1179 = vmatprep.subr.mxu0 0.0
        %1180 = vmatpush1.msra.mxu0 0.0
        %1181 = vmatprep.subr.mxu0 0.0
        %1182 = vmatpush1.msra.mxu0 0.0
        %1183 = vmatprep.subr.mxu0 0.0
        %1184 = vmatpush1.msra.mxu0 0.0
        %1185 = vmatprep.subr.mxu0 0.0
        %1186 = vmatpush1.msra.mxu0 0.0
        %1187 = vmatprep.subr.mxu0 0.0
        %1188 = vmatpush1.msra.mxu0 0.0
        %1189 = vmatprep.subr.mxu0 0.0
        %1190 = vmatpush1.msra.mxu0 0.0
        %1191 = vmatprep.mubr.f32.mxu0 0.0
        %1192 = vmatmul.mubr.f32.gmra.mrb[0].mxu0 %v1122
        %v1193 = vpop.f32.mrb[0].mxu0
        %v1194 = vadd.f32 0.0, %v1193
        %v1195 = vpop.f32.mrb[0].mxu0
        %1196 = vmatprep.mubr.f32.mxu0 0.0
        %1197 = vmatmul.mubr.f32.gmra.mrb[0].mxu0 %v1125
        %v1198 = vpop.f32.mrb[0].mxu0
        %v1199 = vadd.f32 0.0, %v1198
        %v1200 = vpop.f32.mrb[0].mxu0
        %1201 = vdwg.mxu0
        %v1202 = vadd.f32 %v1118, %v1194
        %v1203 = vadd.f32 %v1119, %v1199
        %1204 = vst.msk [vmem:[#allocation2] sm:$0xff] %vm666, %v1202
        %1205 = vst.msk [vmem:[#allocation2 + $0x8] sm:$0xff] %vm666, %v1203
        %p1206 = scmp.eq.s32.totalorder %s34, 3
        // Predicated region
        $region85: #{tpu_custom_call.1} parent=79 // pred_check
          %p1207 = pneg %p1206
        $region86: #{tpu_custom_call.1} parent=79 // pred_check_branch
          %1209 = sbr.rel (%p1207) target = $region88
        $region87: #{tpu_custom_call.1} parent=79 // pred_region
          %v1210 = vld [vmem:[#allocation2] sm:$0xff]
          %v1211 = vld [vmem:[#allocation2 + $0x8] sm:$0xff]
          %v1212 = vld [vmem:[%s9] sm:$0x1]
          %v1214 = vlaneseq
          %v1215 = vshrl.u32 %v1214, 7
          %v1216 = vsub.s32 0, %v1215
          %v1217 = vrot.slane %v1212, %v1216
          %v1219 = vadd.f32 %v1210, %v1217
          %v1220 = vadd.f32 %v1211, %v1217
          %v1221 = vsel %vm666, %v1219, 0.0
          %v1222 = vsel %vm666, %v1220, 0.0
          %v1223 = vadd.f32 %v1221, %v1222
          %v1224 = vrot.slane %v1223, 4
          %v1225 = vadd.f32 %v1223, %v1224
          %v1226 = vrot.slane %v1225, 2
          %v1227 = vadd.f32 %v1225, %v1226
          %v1228 = vrot.slane %v1227, 1
          %v1229 = vadd.f32 %v1227, %v1228
          %v1230 = vrcp.pop 16.0
          %v1231 = vmul.f32 %v1229, %v1230
          %v1232 = vsub.f32 %v1219, %v1231
          %v1233 = vsub.f32 %v1220, %v1231
          %v1234 = vmul.f32 %v1232, %v1232
          %v1235 = vmul.f32 %v1233, %v1233
          %v1236 = vsel %vm666, %v1234, 0.0
          %v1237 = vsel %vm666, %v1235, 0.0
          %v1238 = vadd.f32 %v1236, %v1237
          %v1239 = vrot.slane %v1238, 4
          %v1240 = vadd.f32 %v1238, %v1239
          %v1241 = vrot.slane %v1240, 2
          %v1242 = vadd.f32 %v1240, %v1241
          %v1243 = vrot.slane %v1242, 1
          %v1244 = vadd.f32 %v1242, %v1243
          %v1245 = vmul.f32 %v1244, %v1230
          %v1246 = vadd.f32 %v1245, 1e-05
          %v1247 = vrsqrt.pop %v1246
          %v1248 = vmul.f32 %v1232, %v1247
          %v1249 = vmul.f32 %v1233, %v1247
          %v1250 = vld [vmem:[%s10] sm:$0xff]
          %v1251 = vld [vmem:[%s10 + $0x8] sm:$0xff]
          %v1252 = vld [vmem:[%s10 + $0x10] sm:$0xff]
          %v1253 = vld [vmem:[%s10 + $0x18] sm:$0xff]
          %v1254 = vld [vmem:[%s11] sm:$0xff]
          %v1255 = vld [vmem:[%s11 + $0x8] sm:$0xff]
          %v1256 = vld [vmem:[%s11 + $0x10] sm:$0xff]
          %v1257 = vld [vmem:[%s11 + $0x18] sm:$0xff]
          %v1259 = vsel %vm666, %v1248, 0
          %v1262 = vsel %vm666, %v1249, 0
          %1264 = vmatprep.subr.mxu0 0.0
          %1265 = vmatpush1.msra.mxu0 %v1254
          %1266 = vmatprep.subr.mxu0 0.0
          %1267 = vmatpush1.msra.mxu0 %v1255
          %1268 = vmatprep.subr.mxu0 0.0
          %1269 = vmatpush1.msra.mxu0 %v1256
          %1270 = vmatprep.subr.mxu0 0.0
          %1271 = vmatpush1.msra.mxu0 %v1257
          %1272 = vmatprep.subr.mxu0 0.0
          %1273 = vmatpush1.msra.mxu0 0.0
          %1274 = vmatprep.subr.mxu0 0.0
          %1275 = vmatpush1.msra.mxu0 0.0
          %1276 = vmatprep.subr.mxu0 0.0
          %1277 = vmatpush1.msra.mxu0 0.0
          %1278 = vmatprep.subr.mxu0 0.0
          %1279 = vmatpush1.msra.mxu0 0.0
          %1280 = vmatprep.subr.mxu0 0.0
          %1281 = vmatpush1.msra.mxu0 0.0
          %1282 = vmatprep.subr.mxu0 0.0
          %1283 = vmatpush1.msra.mxu0 0.0
          %1284 = vmatprep.subr.mxu0 0.0
          %1285 = vmatpush1.msra.mxu0 0.0
          %1286 = vmatprep.subr.mxu0 0.0
          %1287 = vmatpush1.msra.mxu0 0.0
          %1288 = vmatprep.subr.mxu0 0.0
          %1289 = vmatpush1.msra.mxu0 0.0
          %1290 = vmatprep.subr.mxu0 0.0
          %1291 = vmatpush1.msra.mxu0 0.0
          %1292 = vmatprep.subr.mxu0 0.0
          %1293 = vmatpush1.msra.mxu0 0.0
          %1294 = vmatprep.subr.mxu0 0.0
          %1295 = vmatpush1.msra.mxu0 0.0
          %1296 = vmatprep.subr.mxu0 0.0
          %1297 = vmatpush1.msra.mxu0 0.0
          %1298 = vmatprep.subr.mxu0 0.0
          %1299 = vmatpush1.msra.mxu0 0.0
          %1300 = vmatprep.subr.mxu0 0.0
          %1301 = vmatpush1.msra.mxu0 0.0
          %1302 = vmatprep.subr.mxu0 0.0
          %1303 = vmatpush1.msra.mxu0 0.0
          %1304 = vmatprep.subr.mxu0 0.0
          %1305 = vmatpush1.msra.mxu0 0.0
          %1306 = vmatprep.subr.mxu0 0.0
          %1307 = vmatpush1.msra.mxu0 0.0
          %1308 = vmatprep.subr.mxu0 0.0
          %1309 = vmatpush1.msra.mxu0 0.0
          %1310 = vmatprep.subr.mxu0 0.0
          %1311 = vmatpush1.msra.mxu0 0.0
          %1312 = vmatprep.subr.mxu0 0.0
          %1313 = vmatpush1.msra.mxu0 0.0
          %1314 = vmatprep.subr.mxu0 0.0
          %1315 = vmatpush1.msra.mxu0 0.0
          %1316 = vmatprep.subr.mxu0 0.0
          %1317 = vmatpush1.msra.mxu0 0.0
          %1318 = vmatprep.subr.mxu0 0.0
          %1319 = vmatpush1.msra.mxu0 0.0
          %1320 = vmatprep.subr.mxu0 0.0
          %1321 = vmatpush1.msra.mxu0 0.0
          %1322 = vmatprep.subr.mxu0 0.0
          %1323 = vmatpush1.msra.mxu0 0.0
          %1324 = vmatprep.subr.mxu0 0.0
          %1325 = vmatpush1.msra.mxu0 0.0
          %1326 = vmatprep.subr.mxu0 0.0
          %1327 = vmatpush1.msra.mxu0 0.0
          %1328 = vmatprep.mubr.f32.mxu0 0.0
          %1329 = vmatmul.mubr.f32.gmra.mrb[0].mxu0 %v1259
          %v1330 = vpop.f32.mrb[0].mxu0
          %v1331 = vadd.f32 0.0, %v1330
          %v1332 = vpop.f32.mrb[0].mxu0
          %1333 = vmatprep.mubr.f32.mxu0 0.0
          %1334 = vmatmul.mubr.f32.gmra.mrb[0].mxu0 %v1262
          %v1335 = vpop.f32.mrb[0].mxu0
          %v1336 = vadd.f32 0.0, %v1335
          %v1337 = vpop.f32.mrb[0].mxu0
          %1338 = vdwg.mxu0
          %1339 = vmatprep.subr.mxu0 0.0
          %1340 = vmatpush1.msra.mxu0 %v1250
          %1341 = vmatprep.subr.mxu0 0.0
          %1342 = vmatpush1.msra.mxu0 %v1251
          %1343 = vmatprep.subr.mxu0 0.0
          %1344 = vmatpush1.msra.mxu0 %v1252
          %1345 = vmatprep.subr.mxu0 0.0
          %1346 = vmatpush1.msra.mxu0 %v1253
          %1347 = vmatprep.subr.mxu0 0.0
          %1348 = vmatpush1.msra.mxu0 0.0
          %1349 = vmatprep.subr.mxu0 0.0
          %1350 = vmatpush1.msra.mxu0 0.0
          %1351 = vmatprep.subr.mxu0 0.0
          %1352 = vmatpush1.msra.mxu0 0.0
          %1353 = vmatprep.subr.mxu0 0.0
          %1354 = vmatpush1.msra.mxu0 0.0
          %1355 = vmatprep.subr.mxu0 0.0
          %1356 = vmatpush1.msra.mxu0 0.0
          %1357 = vmatprep.subr.mxu0 0.0
          %1358 = vmatpush1.msra.mxu0 0.0
          %1359 = vmatprep.subr.mxu0 0.0
          %1360 = vmatpush1.msra.mxu0 0.0
          %1361 = vmatprep.subr.mxu0 0.0
          %1362 = vmatpush1.msra.mxu0 0.0
          %1363 = vmatprep.subr.mxu0 0.0
          %1364 = vmatpush1.msra.mxu0 0.0
          %1365 = vmatprep.subr.mxu0 0.0
          %1366 = vmatpush1.msra.mxu0 0.0
          %1367 = vmatprep.subr.mxu0 0.0
          %1368 = vmatpush1.msra.mxu0 0.0
          %1369 = vmatprep.subr.mxu0 0.0
          %1370 = vmatpush1.msra.mxu0 0.0
          %1371 = vmatprep.subr.mxu0 0.0
          %1372 = vmatpush1.msra.mxu0 0.0
          %1373 = vmatprep.subr.mxu0 0.0
          %1374 = vmatpush1.msra.mxu0 0.0
          %1375 = vmatprep.subr.mxu0 0.0
          %1376 = vmatpush1.msra.mxu0 0.0
          %1377 = vmatprep.subr.mxu0 0.0
          %1378 = vmatpush1.msra.mxu0 0.0
          %1379 = vmatprep.subr.mxu0 0.0
          %1380 = vmatpush1.msra.mxu0 0.0
          %1381 = vmatprep.subr.mxu0 0.0
          %1382 = vmatpush1.msra.mxu0 0.0
          %1383 = vmatprep.subr.mxu0 0.0
          %1384 = vmatpush1.msra.mxu0 0.0
          %1385 = vmatprep.subr.mxu0 0.0
          %1386 = vmatpush1.msra.mxu0 0.0
          %1387 = vmatprep.subr.mxu0 0.0
          %1388 = vmatpush1.msra.mxu0 0.0
          %1389 = vmatprep.subr.mxu0 0.0
          %1390 = vmatpush1.msra.mxu0 0.0
          %1391 = vmatprep.subr.mxu0 0.0
          %1392 = vmatpush1.msra.mxu0 0.0
          %1393 = vmatprep.subr.mxu0 0.0
          %1394 = vmatpush1.msra.mxu0 0.0
          %1395 = vmatprep.subr.mxu0 0.0
          %1396 = vmatpush1.msra.mxu0 0.0
          %1397 = vmatprep.subr.mxu0 0.0
          %1398 = vmatpush1.msra.mxu0 0.0
          %1399 = vmatprep.subr.mxu0 0.0
          %1400 = vmatpush1.msra.mxu0 0.0
          %1401 = vmatprep.subr.mxu0 0.0
          %1402 = vmatpush1.msra.mxu0 0.0
          %1403 = vmatprep.mubr.f32.mxu0 0.0
          %1404 = vmatmul.mubr.f32.gmra.mrb[0].mxu0 %v668
          %v1405 = vpop.f32.mrb[0].mxu0
          %v1406 = vadd.f32 %v1331, %v1405
          %v1407 = vpop.f32.mrb[0].mxu0
          %1408 = vmatprep.mubr.f32.mxu0 0.0
          %1409 = vmatmul.mubr.f32.gmra.mrb[0].mxu0 %v671
          %v1410 = vpop.f32.mrb[0].mxu0
          %v1411 = vadd.f32 %v1336, %v1410
          %v1412 = vpop.f32.mrb[0].mxu0
          %1413 = vdwg.mxu0
          %v1414 = vld [vmem:[%s12] sm:$0x1]
          %v1416 = vlaneseq
          %v1417 = vshrl.u32 %v1416, 7
          %v1418 = vsub.s32 0, %v1417
          %v1419 = vrot.slane %v1414, %v1418
          %v1421 = vadd.f32 %v1406, %v1419
          %v1422 = vadd.f32 %v1411, %v1419
          %vm1423 = vcmask 523264
          %v1424 = vsel %vm1423, %v1421, 0.0
          %v1425 = vsel %vm1423, %v1422, 0.0
          %v1426 = vadd.f32 %v1424, %v1425
          %v1427 = vrot.slane %v1426, 4
          %v1428 = vadd.f32 %v1426, %v1427
          %v1429 = vrot.slane %v1428, 2
          %v1430 = vadd.f32 %v1428, %v1429
          %v1431 = vrot.slane %v1430, 1
          %v1432 = vadd.f32 %v1430, %v1431
          %v1433 = vmul.f32 %v1432, %v1230
          %v1434 = vsub.f32 %v1421, %v1433
          %v1435 = vsub.f32 %v1422, %v1433
          %v1436 = vmul.f32 %v1434, %v1434
          %v1437 = vmul.f32 %v1435, %v1435
          %v1438 = vsel %vm1423, %v1436, 0.0
          %v1439 = vsel %vm1423, %v1437, 0.0
          %v1440 = vadd.f32 %v1438, %v1439
          %v1441 = vrot.slane %v1440, 4
          %v1442 = vadd.f32 %v1440, %v1441
          %v1443 = vrot.slane %v1442, 2
          %v1444 = vadd.f32 %v1442, %v1443
          %v1445 = vrot.slane %v1444, 1
          %v1446 = vadd.f32 %v1444, %v1445
          %v1447 = vmul.f32 %v1446, %v1230
          %v1448 = vadd.f32 %v1447, 1e-05
          %v1449 = vrsqrt.pop %v1448
          %v1450 = vmul.f32 %v1434, %v1449
          %v1451 = vmul.f32 %v1435, %v1449
          %v1452 = vmax.f32 %v1450, 0.0
          %v1453 = vmax.f32 %v1451, 0.0
          %v1454 = vld [vmem:[%s13] sm:$0xff]
          %v1455 = vld [vmem:[%s13 + $0x8] sm:$0xff]
          %v1456 = vld [vmem:[%s13 + $0x10] sm:$0xff]
          %v1457 = vld [vmem:[%s13 + $0x18] sm:$0xff]
          %v1458 = vld [vmem:[%s13 + $0x20] sm:$0xff]
          %v1459 = vld [vmem:[%s13 + $0x28] sm:$0xff]
          %v1460 = vld [vmem:[%s13 + $0x30] sm:$0xff]
          %v1461 = vld [vmem:[%s13 + $0x38] sm:$0xff]
          %v1462 = vld [vmem:[%s14] sm:$0x1]
          %v1464 = vlaneseq
          %v1465 = vshrl.u32 %v1464, 7
          %v1466 = vsub.s32 0, %v1465
          %v1467 = vrot.slane %v1462, %v1466
          %v1470 = vsel %vm1423, %v1452, 0
          %v1473 = vsel %vm1423, %v1453, 0
          %1475 = vmatprep.subr.mxu0 0.0
          %1476 = vmatpush1.msra.mxu0 %v1454
          %1477 = vmatprep.subr.mxu0 0.0
          %1478 = vmatpush1.msra.mxu0 %v1455
          %1479 = vmatprep.subr.mxu0 0.0
          %1480 = vmatpush1.msra.mxu0 %v1456
          %1481 = vmatprep.subr.mxu0 0.0
          %1482 = vmatpush1.msra.mxu0 %v1457
          %1483 = vmatprep.subr.mxu0 0.0
          %1484 = vmatpush1.msra.mxu0 %v1458
          %1485 = vmatprep.subr.mxu0 0.0
          %1486 = vmatpush1.msra.mxu0 %v1459
          %1487 = vmatprep.subr.mxu0 0.0
          %1488 = vmatpush1.msra.mxu0 %v1460
          %1489 = vmatprep.subr.mxu0 0.0
          %1490 = vmatpush1.msra.mxu0 %v1461
          %1491 = vmatprep.subr.mxu0 0.0
          %1492 = vmatpush1.msra.mxu0 0.0
          %1493 = vmatprep.subr.mxu0 0.0
          %1494 = vmatpush1.msra.mxu0 0.0
          %1495 = vmatprep.subr.mxu0 0.0
          %1496 = vmatpush1.msra.mxu0 0.0
          %1497 = vmatprep.subr.mxu0 0.0
          %1498 = vmatpush1.msra.mxu0 0.0
          %1499 = vmatprep.subr.mxu0 0.0
          %1500 = vmatpush1.msra.mxu0 0.0
          %1501 = vmatprep.subr.mxu0 0.0
          %1502 = vmatpush1.msra.mxu0 0.0
          %1503 = vmatprep.subr.mxu0 0.0
          %1504 = vmatpush1.msra.mxu0 0.0
          %1505 = vmatprep.subr.mxu0 0.0
          %1506 = vmatpush1.msra.mxu0 0.0
          %1507 = vmatprep.subr.mxu0 0.0
          %1508 = vmatpush1.msra.mxu0 0.0
          %1509 = vmatprep.subr.mxu0 0.0
          %1510 = vmatpush1.msra.mxu0 0.0
          %1511 = vmatprep.subr.mxu0 0.0
          %1512 = vmatpush1.msra.mxu0 0.0
          %1513 = vmatprep.subr.mxu0 0.0
          %1514 = vmatpush1.msra.mxu0 0.0
          %1515 = vmatprep.subr.mxu0 0.0
          %1516 = vmatpush1.msra.mxu0 0.0
          %1517 = vmatprep.subr.mxu0 0.0
          %1518 = vmatpush1.msra.mxu0 0.0
          %1519 = vmatprep.subr.mxu0 0.0
          %1520 = vmatpush1.msra.mxu0 0.0
          %1521 = vmatprep.subr.mxu0 0.0
          %1522 = vmatpush1.msra.mxu0 0.0
          %1523 = vmatprep.subr.mxu0 0.0
          %1524 = vmatpush1.msra.mxu0 0.0
          %1525 = vmatprep.subr.mxu0 0.0
          %1526 = vmatpush1.msra.mxu0 0.0
          %1527 = vmatprep.subr.mxu0 0.0
          %1528 = vmatpush1.msra.mxu0 0.0
          %1529 = vmatprep.subr.mxu0 0.0
          %1530 = vmatpush1.msra.mxu0 0.0
          %1531 = vmatprep.subr.mxu0 0.0
          %1532 = vmatpush1.msra.mxu0 0.0
          %1533 = vmatprep.subr.mxu0 0.0
          %1534 = vmatpush1.msra.mxu0 0.0
          %1535 = vmatprep.subr.mxu0 0.0
          %1536 = vmatpush1.msra.mxu0 0.0
          %1537 = vmatprep.subr.mxu0 0.0
          %1538 = vmatpush1.msra.mxu0 0.0
          %1539 = vmatprep.mubr.f32.mxu0 0.0
          %1540 = vmatmul.mubr.f32.gmra.mrb[0].mxu0 %v1470
          %v1541 = vpop.f32.mrb[0].mxu0
          %v1542 = vadd.f32 %v1467, %v1541
          %v1543 = vpop.f32.mrb[0].mxu0
          %1544 = vmatprep.mubr.f32.mxu0 0.0
          %1545 = vmatmul.mubr.f32.gmra.mrb[0].mxu0 %v1473
          %v1546 = vpop.f32.mrb[0].mxu0
          %v1547 = vadd.f32 %v1467, %v1546
          %v1548 = vpop.f32.mrb[0].mxu0
          %1549 = vdwg.mxu0
          %1550 = vst.msk [vmem:[%s605] sm:$0xff] %vm666, %v1542
          %1551 = vst.msk [vmem:[%s605 + $0x8] sm:$0xff] %vm666, %v1547
        $region88: #{tpu_custom_call.1} parent=79 // pred_fallthru
          _
        %s1552 = sand.u32 %s409, 1
        %s1553 = scalar_lea.sflag [#allocation4], %s1552
        %s1554 = sand.u32 %s409, 1
        %s1555 = smul.addr %s1554, 16
        %s1556 = scalar_lea.vmem [#allocation3], %s1555
        // Predicated region
        $region89: #{tpu_custom_call.1} parent=79 // pred_check
          %p1557 = pneg %p419
        $region90: #{tpu_custom_call.1} parent=79 // pred_check_branch
          %1559 = sbr.rel (%p1557) target = $region92
        $region91: #{tpu_custom_call.1} parent=79 // pred_region
          %s1561 = ssub.s32 256, 256
          %1562 = vsyncadd %s1553, %s1561
          %s1563 = smul.addr %s33, 2
          %s1564 = smul.addr %s1563, 128
          %s1565 = scalar_lea.hbm %s15, %s1564
          %s1566 = sshll.u32 %s1556, 4
          %s1567 = int_to_ptr.vmem [resolvable:$true] %s1566
          %1572 = dma.vmem_to_hbm [thread:$0]  %s1567, 256, %s1565, %s1553, 128, 128, 8
        $region92: #{tpu_custom_call.1} parent=79 // pred_fallthru
          _
      $region80: #{tpu_custom_call.1} parent=5 // pred_fallthru
        _
      %p1573 = scmp.le.s32.totalorder 2, %s24
      // Predicated region
      $region93: #{tpu_custom_call.1} parent=5 // pred_check
        %p1574 = pneg %p1573
      $region94: #{tpu_custom_call.1} parent=5 // pred_check_branch
        %1576 = sbr.rel (%p1574) target = $region96
      $region95: #{tpu_custom_call.1} parent=5 // pred_region
        %s1577 = ssub.s32 %s24, 2
        // Predicated region
        $region97: #{tpu_custom_call.1} parent=95 // pred_check
          %p1578 = pneg %p425
        $region98: #{tpu_custom_call.1} parent=95 // pred_check_branch
          %1580 = sbr.rel (%p1578) target = $region100
        $region99: #{tpu_custom_call.1} parent=95 // pred_region
          %s1581 = sand.u32 %s410, 1
          %s1582 = scalar_lea.sflag [#allocation4], %s1581
          %s1583 = sand.u32 %s410, 1
          %s1584 = smul.addr %s1583, 16
          %s1585 = scalar_lea.vmem [#allocation3], %s1584
          %1586 = dma.done %s1582, 256
        $region100: #{tpu_custom_call.1} parent=95 // pred_fallthru
          _
      $region96: #{tpu_custom_call.1} parent=5 // pred_fallthru
        _
    $region6: #{tpu_custom_call.1} parent=1 // loop_footer
      %s28 = sadd.s32 1, %s24
    $region7: #{tpu_custom_call.1} parent=1 // loop_footer_branch
      %23 = sbr.rel target = $region3
    $region8: #{tpu_custom_call.1} parent=1 // loop_exit
      _
    %1587 = vsyncpa [#allocation4], 1
    %s1588 = scalar_lea.sflag [#allocation4], 1
    %1589 = vsyncpa %s1588, 1

</llo_original>
